<compile_context>
chip_gen: v7x
topology: tpu7x:2x2x1
jax: 0.10.0
libtpu: 0.0.40
codegen_flags: <defaults>
</compile_context>

<pallas_src>
import math
from functools import partial

import numpy as np
import jax
import jax.numpy as jnp
from jax.experimental import pallas as pl
from jax.experimental.pallas import tpu as pltpu

EPS = 1e-5  # BatchNorm eps (timm BatchNormAct2d default)


# ----------------------------------------------------------------------------
# Pallas kernels
# ----------------------------------------------------------------------------
def _pre_conv1_kernel(x_ref, s1_ref, t1_ref, w1_ref, b1_ref, xn_ref, y_ref):
    """norm1 (folded BN) + ReLU, then conv1 1x1 (norm2 folded into W/b) + ReLU."""
    xn = jnp.maximum(x_ref[...] * s1_ref[...] + t1_ref[...], 0.0)
    xn_ref[...] = xn  # normed input == residual-branch shortcut
    y = jnp.dot(xn.astype(jnp.bfloat16), w1_ref[...],
                preferred_element_type=jnp.float32) + b1_ref[...]
    y_ref[...] = jnp.maximum(y, 0.0)


def _block_tail_kernel(p_ref, w2_ref, b2_ref, pool_ref, unpool_ref,
                       wse1_ref, bse1_ref, wse2_ref,
                       s3_ref, t3_ref, bse2s3_ref, w3_ref, b3_ref,
                       sc_ref, wd_ref, bd_ref, o_ref):
    """grouped 3x3 conv (block-diag matmul) + SE + norm3 + conv3 + shortcut add."""
    bf16, f32 = jnp.bfloat16, jnp.float32
    # grouped conv2: single matmul against block-diagonally packed weights
    c2 = jnp.dot(p_ref[...].astype(bf16), w2_ref[...],
                 preferred_element_type=f32) + b2_ref[...]            # (M1, Cb)
    # SE global average pool as a static pooling matmul (rows -> batch)
    pooled = jnp.dot(pool_ref[...], c2, preferred_element_type=f32)   # (Bp, Cb)
    z = jnp.maximum(jnp.dot(pooled.astype(bf16), wse1_ref[...],
                            preferred_element_type=f32) + bse1_ref[...], 0.0)
    u = jnp.dot(z.astype(bf16), wse2_ref[...],
                preferred_element_type=f32) + bse2s3_ref[...]         # fc2 bias
    gate = 1.0 / (1.0 + jnp.exp(-u))                                  # sigmoid (Bp, Cb)
    # norm3 scale commutes with the per-(batch,channel) gate -> fold: gate*s3
    grows = jnp.dot(unpool_ref[...], gate * s3_ref[...],
                    preferred_element_type=f32)                       # (M1, Cb)
    h = jnp.maximum(c2 * grows + t3_ref[...], 0.0)                    # norm3 + act3
    y3 = jnp.dot(h.astype(bf16), w3_ref[...],
                 preferred_element_type=f32) + b3_ref[...]            # conv3 1x1
    sc = jnp.dot(sc_ref[...].astype(bf16), wd_ref[...],
                 preferred_element_type=f32) + bd_ref[...]            # downsample 1x1
    o_ref[...] = y3 + sc                                              # no final act


# ----------------------------------------------------------------------------
# Parameter init (deterministic) and one-time prep (fold BN, pack weights)
# ----------------------------------------------------------------------------
def init_params(key, in_chs, out_chs, *, bottle_ratio=1.0, group_size=16,
                se_ratio=0.25, stride=1):
    bott = int(round(out_chs * bottle_ratio))
    assert bott % group_size == 0
    groups = bott // group_size
    se_chs = int(round(in_chs * se_ratio))
    has_ds = (in_chs != out_chs) or (stride != 1)
    ks = list(jax.random.split(key, 24))

    def conv_w(k, cout, cin_g, ksize):
        std = math.sqrt(2.0 / (ksize * ksize * cout))
        return std * jax.random.normal(k, (cout, cin_g, ksize, ksize), jnp.float32)

    def bn(k, c):
        k1, k2, k3, k4 = jax.random.split(k, 4)
        return dict(gamma=1.0 + 0.1 * jax.random.normal(k1, (c,), jnp.float32),
                    beta=0.1 * jax.random.normal(k2, (c,), jnp.float32),
                    mean=0.1 * jax.random.normal(k3, (c,), jnp.float32),
                    var=0.5 + jax.random.uniform(k4, (c,), jnp.float32))

    raw = dict(
        norm1=bn(ks[0], in_chs),
        conv1_w=conv_w(ks[1], bott, in_chs, 1),
        conv1_b=0.05 * jax.random.normal(ks[2], (bott,), jnp.float32),
        norm2=bn(ks[3], bott),
        conv2_w=conv_w(ks[4], bott, bott // groups, 3),
        conv2_b=0.05 * jax.random.normal(ks[5], (bott,), jnp.float32),
        se_fc1_w=conv_w(ks[6], se_chs, bott, 1),
        se_fc1_b=0.05 * jax.random.normal(ks[7], (se_chs,), jnp.float32),
        se_fc2_w=conv_w(ks[8], bott, se_chs, 1),
        se_fc2_b=0.05 * jax.random.normal(ks[9], (bott,), jnp.float32),
        norm3=bn(ks[10], bott),
        conv3_w=conv_w(ks[11], out_chs, bott, 1),
        conv3_b=0.05 * jax.random.normal(ks[12], (out_chs,), jnp.float32),
    )
    if has_ds:
        raw['downsample_w'] = conv_w(ks[13], out_chs, in_chs, 1)
        raw['downsample_b'] = 0.05 * jax.random.normal(ks[14], (out_chs,), jnp.float32)
    meta = dict(groups=groups, has_ds=has_ds, bottleneck_chs=bott, se_chs=se_chs)
    return raw, meta


def _fold_bn(bn):
    s = np.asarray(bn['gamma']) / np.sqrt(np.asarray(bn['var']) + EPS)
    t = np.asarray(bn['beta']) - np.asarray(bn['mean']) * s
    return s.astype(np.float32), t.astype(np.float32)


def prepare_params(raw, *, groups, has_ds):
    """Host-side, one-time: fold BN, pack grouped weights block-diagonally, cast bf16."""
    f32, bf16 = jnp.float32, jnp.bfloat16
    Cin = raw['conv1_w'].shape[1]
    Cb = raw['conv2_w'].shape[0]
    Cout = raw['conv3_w'].shape[0]
    s1, t1 = _fold_bn(raw['norm1'])
    s2, t2 = _fold_bn(raw['norm2'])
    s3, t3 = _fold_bn(raw['norm3'])

    # conv1 with norm2 folded in: (x @ W1 + b1)*s2 + t2 == x @ (W1*s2) + (b1*s2 + t2)
    W1 = np.asarray(raw['conv1_w'])[:, :, 0, 0].T                      # (Cin, Cb)
    W1f = W1 * s2[None, :]
    b1f = np.asarray(raw['conv1_b']) * s2 + t2

    # grouped 3x3 conv -> block-diagonal (9*Cb, Cb) matrix, tap-major columns
    w2 = np.asarray(raw['conv2_w'], np.float32)                        # (Cb, Cin_g, 3, 3)
    cin_g = Cb // groups
    cout_g = Cb // groups
    W2bd = np.zeros((9 * Cb, Cb), np.float32)
    for g in range(groups):
        for t in range(9):
            kh, kw = t // 3, t % 3
            rows = slice(t * Cb + g * cin_g, t * Cb + (g + 1) * cin_g)
            cols = slice(g * cout_g, (g + 1) * cout_g)
            W2bd[rows, cols] = w2[cols, :, kh, kw].T

    # SE weights; pad the tiny hidden dim to 128 lanes (zero-padded -> exact)
    se_chs = raw['se_fc1_w'].shape[0]
    se_p = 128
    assert se_chs <= se_p
    wse1 = np.zeros((Cb, se_p), np.float32)
    wse1[:, :se_chs] = np.asarray(raw['se_fc1_w'])[:, :, 0, 0].T
    bse1 = np.zeros((1, se_p), np.float32)
    bse1[0, :se_chs] = np.asarray(raw['se_fc1_b'])
    wse2 = np.zeros((se_p, Cb), np.float32)
    wse2[:se_chs, :] = np.asarray(raw['se_fc2_w'])[:, :, 0, 0].T
    bse2 = np.asarray(raw['se_fc2_b'])[None, :]

    W3 = np.asarray(raw['conv3_w'])[:, :, 0, 0].T                      # (Cb, Cout)
    b3 = np.asarray(raw['conv3_b'])[None, :]

    if has_ds:
        Wd = np.asarray(raw['downsample_w'])[:, :, 0, 0].T             # (Cin, Cout)
        bd = np.asarray(raw['downsample_b'])[None, :]
    else:
        # identity shortcut (in_chs == out_chs, stride == 1) via exact eye weight
        Wd = np.eye(Cout, dtype=np.float32)
        bd = np.zeros((1, Cout), np.float32)
    # TODO(synk): downsample='avg' and downsample=''/None variants of
    # create_shortcut are not implemented (default 'conv1x1' + identity covered).

    return dict(
        s1=jnp.asarray(s1[None, :], f32), t1=jnp.asarray(t1[None, :], f32),
        w1=jnp.asarray(W1f, bf16), b1=jnp.asarray(b1f[None, :], f32),
        w2=jnp.asarray(W2bd, bf16), b2=jnp.asarray(np.asarray(raw['conv2_b'])[None, :], f32),
        wse1=jnp.asarray(wse1, bf16), bse1=jnp.asarray(bse1, f32),
        wse2=jnp.asarray(wse2, bf16), bse2=jnp.asarray(bse2, f32),
        s3=jnp.asarray(s3[None, :], f32), t3=jnp.asarray(t3[None, :], f32),
        w3=jnp.asarray(W3, bf16), b3=jnp.asarray(b3, f32),
        wd=jnp.asarray(Wd, bf16), bd=jnp.asarray(bd, f32),
    )


# ----------------------------------------------------------------------------
# Forward pass (2 pallas_calls + tiny XLA glue)
# ----------------------------------------------------------------------------
def prebottleneck_forward(x_nchw, params, *, stride):
    f32 = jnp.float32
    N, Cin, H, W = x_nchw.shape
    Cb = params['w1'].shape[1]
    Cout = params['w3'].shape[1]

    x = jnp.transpose(x_nchw, (0, 2, 3, 1)).astype(f32)   # NHWC
    M0 = N * H * W
    x2d = x.reshape(M0, Cin)

    # ---- call 1: norm1 + conv1(+folded norm2) + ReLU, row-tiled, parallel grid
    TM = 128
    Mp = ((M0 + TM - 1) // TM) * TM
    if Mp != M0:  # no-op for the test config; only pads when rows don't tile
        x2d = jnp.zeros((Mp, Cin), f32).at[:M0].set(x2d)
    xn2d, y2d = pl.pallas_call(
        _pre_conv1_kernel,
        grid=(Mp // TM,),
        in_specs=[
            pl.BlockSpec((TM, Cin), lambda i: (i, 0)),
            pl.BlockSpec((1, Cin), lambda i: (0, 0)),
            pl.BlockSpec((1, Cin), lambda i: (0, 0)),
            pl.BlockSpec((Cin, Cb), lambda i: (0, 0)),
            pl.BlockSpec((1, Cb), lambda i: (0, 0)),
        ],
        out_specs=(pl.BlockSpec((TM, Cin), lambda i: (i, 0)),
                   pl.BlockSpec((TM, Cb), lambda i: (i, 0))),
        out_shape=(jax.ShapeDtypeStruct((Mp, Cin), f32),
                   jax.ShapeDtypeStruct((Mp, Cb), f32)),
        compiler_params=pltpu.CompilerParams(dimension_semantics=("parallel",)),
    )(x2d, params['s1'], params['t1'], params['w1'], params['b1'])
    if Mp != M0:
        xn2d, y2d = xn2d[:M0], y2d[:M0]

    # ---- XLA glue: 3x3 window taps (pad=1) with stride, + shortcut subsample
    Ho = (H + 2 - 3) // stride + 1
    Wo = (W + 2 - 3) // stride + 1
    y4 = y2d.reshape(N, H, W, Cb)
    ypad = jnp.pad(y4, ((0, 0), (1, 1), (1, 1), (0, 0)))
    taps = [ypad[:, kh:kh + (Ho - 1) * stride + 1:stride,
                 kw:kw + (Wo - 1) * stride + 1:stride, :]
            for kh in range(3) for kw in range(3)]
    patches = jnp.concatenate(taps, axis=-1).reshape(N * Ho * Wo, 9 * Cb)
    xn4 = xn2d.reshape(N, H, W, Cin)
    sc2d = xn4[:, ::stride, ::stride, :].reshape(N * Ho * Wo, Cin)

    # static pool / unpool matrices for the SE global average pool (trace-time consts)
    HWo = Ho * Wo
    M1 = N * HWo
    BP = ((N + 7) // 8) * 8
    pool_np = np.zeros((BP, M1), np.float32)
    unpool_np = np.zeros((M1, BP), np.float32)
    for n in range(N):
        pool_np[n, n * HWo:(n + 1) * HWo] = 1.0 / HWo
        unpool_np[n * HWo:(n + 1) * HWo, n] = 1.0
    pool = jnp.asarray(pool_np)
    unpool = jnp.asarray(unpool_np)

    # ---- call 2: grouped conv2 + SE + norm3 + conv3 + downsample + residual add
    out2d = pl.pallas_call(
        _block_tail_kernel,
        out_shape=jax.ShapeDtypeStruct((M1, Cout), f32),
    )(patches, params['w2'], params['b2'], pool, unpool,
      params['wse1'], params['bse1'], params['wse2'],
      params['s3'], params['t3'], params['bse2'], params['w3'], params['b3'],
      sc2d, params['wd'], params['bd'])

    return jnp.transpose(out2d.reshape(N, Ho, Wo, Cout), (0, 3, 1, 2))  # NCHW


# ----------------------------------------------------------------------------
# Pure-JAX (f32, lax.conv) reference for correctness checking
# ----------------------------------------------------------------------------
def reference_forward(x_nchw, raw, *, stride, groups, has_ds):
    f32 = jnp.float32
    x = jnp.transpose(x_nchw, (0, 2, 3, 1)).astype(f32)

    def bn_act(v, bn):
        s = bn['gamma'] / jnp.sqrt(bn['var'] + EPS)
        t = bn['beta'] - bn['mean'] * s
        return jnp.maximum(v * s + t, 0.0)

    def conv(v, w, b, stride=1, padding=0, groups=1):
        wk = jnp.transpose(w, (2, 3, 1, 0)).astype(f32)   # HWIO
        o = jax.lax.conv_general_dilated(
            v, wk, (stride, stride), [(padding, padding), (padding, padding)],
            dimension_numbers=('NHWC', 'HWIO', 'NHWC'),
            feature_group_count=groups, precision=jax.lax.Precision.HIGHEST)
        return o + b

    xn = bn_act(x, raw['norm1'])
    shortcut = xn
    v = conv(xn, raw['conv1_w'], raw['conv1_b'])
    v = bn_act(v, raw['norm2'])
    v = conv(v, raw['conv2_w'], raw['conv2_b'], stride=stride, padding=1, groups=groups)
    se = jnp.mean(v, axis=(1, 2), keepdims=True)
    se = jnp.maximum(conv(se, raw['se_fc1_w'], raw['se_fc1_b']), 0.0)
    se = jax.nn.sigmoid(conv(se, raw['se_fc2_w'], raw['se_fc2_b']))
    v = v * se
    v = bn_act(v, raw['norm3'])
    v = conv(v, raw['conv3_w'], raw['conv3_b'])
    sc = conv(shortcut, raw['downsample_w'], raw['downsample_b'], stride=stride) \
        if has_ds else shortcut
    return jnp.transpose(v + sc, (0, 3, 1, 2))


# ----------------------------------------------------------------------------
if __name__ == "__main__":
    # PreBottleneck(in_chs=32, out_chs=64, stride=2, bottle_ratio=1, group_size=16,
    #               se_ratio=0.25, downsample='conv1x1')  -> groups=4, se_chs=8
    in_chs, out_chs, stride = 32, 64, 2
    N, H, W = 2, 16, 16

    key = jax.random.PRNGKey(0)
    kp, kx = jax.random.split(key)
    raw, meta = init_params(kp, in_chs, out_chs, bottle_ratio=1.0, group_size=16,
                            se_ratio=0.25, stride=stride)
    params = prepare_params(raw, groups=meta['groups'], has_ds=meta['has_ds'])

    x = jax.random.normal(kx, (N, in_chs, H, W), jnp.float32)

    fwd = jax.jit(partial(prebottleneck_forward, stride=stride))
    out = jax.block_until_ready(fwd(x, params))

    assert out.shape == (N, out_chs, H // stride, W // stride), out.shape
    assert bool(jnp.all(jnp.isfinite(out)))

    ref = reference_forward(x, raw, stride=stride, groups=meta['groups'],
                            has_ds=meta['has_ds'])
    max_err = float(jnp.max(jnp.abs(out - ref)))
    assert max_err < 1e-1, f"max abs err vs f32 reference: {max_err}"

    print("KERNEL_OK")
</pallas_src>

<mosaic_0001>
module attributes {stable_mosaic.version = 11 : i64} {
  func.func @_pre_conv1_kernel(%arg0: i32, %arg1: memref<128x32xf32, #tpu.memory_space<vmem>>, %arg2: memref<1x32xf32, #tpu.memory_space<vmem>>, %arg3: memref<1x32xf32, #tpu.memory_space<vmem>>, %arg4: memref<32x64xbf16, #tpu.memory_space<vmem>>, %arg5: memref<1x64xf32, #tpu.memory_space<vmem>>, %arg6: memref<128x32xf32, #tpu.memory_space<vmem>>, %arg7: memref<128x64xf32, #tpu.memory_space<vmem>>) attributes {dimension_semantics = [#tpu.dimension_semantics<parallel>], iteration_bounds = array<i64: 4>, scalar_prefetch = 0 : i64, scratch_operands = 0 : i64, tpu.core_type = #tpu.core_type<tc>, window_params = [{transform_indices = @transform_0, window_bounds = array<i64: 128, 32>}, {pipeline_mode = #tpu.pipeline_mode<synchronous>, transform_indices = @transform_1, window_bounds = array<i64: 1, 32>}, {pipeline_mode = #tpu.pipeline_mode<synchronous>, transform_indices = @transform_2, window_bounds = array<i64: 1, 32>}, {pipeline_mode = #tpu.pipeline_mode<synchronous>, transform_indices = @transform_3, window_bounds = array<i64: 32, 64>}, {pipeline_mode = #tpu.pipeline_mode<synchronous>, transform_indices = @transform_4, window_bounds = array<i64: 1, 64>}, {transform_indices = @transform_5, window_bounds = array<i64: 128, 32>}, {transform_indices = @transform_6, window_bounds = array<i64: 128, 64>}]} {
    %c0 = arith.constant 0 : index
    %c0_0 = arith.constant 0 : index
    %0 = vector.load %arg1[%c0, %c0_0] : memref<128x32xf32, #tpu.memory_space<vmem>>, vector<128x32xf32>
    %c0_1 = arith.constant 0 : index
    %c0_2 = arith.constant 0 : index
    %1 = vector.load %arg2[%c0_1, %c0_2] : memref<1x32xf32, #tpu.memory_space<vmem>>, vector<1x32xf32>
    %2 = vector.broadcast %1 : vector<1x32xf32> to vector<128x32xf32>
    %3 = arith.mulf %0, %2 : vector<128x32xf32>
    %c0_3 = arith.constant 0 : index
    %c0_4 = arith.constant 0 : index
    %4 = vector.load %arg3[%c0_3, %c0_4] : memref<1x32xf32, #tpu.memory_space<vmem>>, vector<1x32xf32>
    %5 = vector.broadcast %4 : vector<1x32xf32> to vector<128x32xf32>
    %6 = arith.addf %3, %5 : vector<128x32xf32>
    %cst = arith.constant 0.000000e+00 : f32
    %7 = vector.broadcast %cst : f32 to vector<128x32xf32>
    %8 = arith.maximumf %6, %7 : vector<128x32xf32>
    %c0_5 = arith.constant 0 : index
    %c0_6 = arith.constant 0 : index
    %9 = vector.load %arg6[%c0_5, %c0_6] : memref<128x32xf32, #tpu.memory_space<vmem>>, vector<128x32xf32>
    tpu.vector_store %arg6[%c0_5, %c0_6], %8 {strides = array<i32>} : memref<128x32xf32, #tpu.memory_space<vmem>>, vector<128x32xf32>,
    %10 = arith.truncf %8 : vector<128x32xf32> to vector<128x32xbf16>
    %c0_7 = arith.constant 0 : index
    %c0_8 = arith.constant 0 : index
    %11 = vector.load %arg4[%c0_7, %c0_8] : memref<32x64xbf16, #tpu.memory_space<vmem>>, vector<32x64xbf16>
    %cst_9 = arith.constant dense<0.000000e+00> : vector<128x64xf32>
    %12 = tpu.matmul %10, %11, %cst_9 {dimension_numbers = #tpu.dot_dimension_numbers<[1], [0], [0], [1], [0, 0, 1, 1], [], []>} : vector<128x32xbf16>, vector<32x64xbf16>, vector<128x64xf32> -> vector<128x64xf32>
    %c0_10 = arith.constant 0 : index
    %c0_11 = arith.constant 0 : index
    %13 = vector.load %arg5[%c0_10, %c0_11] : memref<1x64xf32, #tpu.memory_space<vmem>>, vector<1x64xf32>
    %14 = vector.broadcast %13 : vector<1x64xf32> to vector<128x64xf32>
    %15 = arith.addf %12, %14 : vector<128x64xf32>
    %cst_12 = arith.constant 0.000000e+00 : f32
    %16 = vector.broadcast %cst_12 : f32 to vector<128x64xf32>
    %17 = arith.maximumf %15, %16 : vector<128x64xf32>
    %c0_13 = arith.constant 0 : index
    %c0_14 = arith.constant 0 : index
    %18 = vector.load %arg7[%c0_13, %c0_14] : memref<128x64xf32, #tpu.memory_space<vmem>>, vector<128x64xf32>
    tpu.vector_store %arg7[%c0_13, %c0_14], %17 {strides = array<i32>} : memref<128x64xf32, #tpu.memory_space<vmem>>, vector<128x64xf32>,
    return
  }
  func.func @transform_0(%arg0: i32) -> (i32, i32) {
    %c0_i32 = arith.constant 0 : i32
    %c0_i32_0 = arith.constant 0 : i32
    return %arg0, %c0_i32 : i32, i32
  }
  func.func @transform_1(%arg0: i32) -> (i32, i32) {
    %c0_i32 = arith.constant 0 : i32
    %c0_i32_0 = arith.constant 0 : i32
    %c0_i32_1 = arith.constant 0 : i32
    return %c0_i32, %c0_i32_0 : i32, i32
  }
  func.func @transform_2(%arg0: i32) -> (i32, i32) {
    %c0_i32 = arith.constant 0 : i32
    %c0_i32_0 = arith.constant 0 : i32
    %c0_i32_1 = arith.constant 0 : i32
    return %c0_i32, %c0_i32_0 : i32, i32
  }
  func.func @transform_3(%arg0: i32) -> (i32, i32) {
    %c0_i32 = arith.constant 0 : i32
    %c0_i32_0 = arith.constant 0 : i32
    %c0_i32_1 = arith.constant 0 : i32
    return %c0_i32, %c0_i32_0 : i32, i32
  }
  func.func @transform_4(%arg0: i32) -> (i32, i32) {
    %c0_i32 = arith.constant 0 : i32
    %c0_i32_0 = arith.constant 0 : i32
    %c0_i32_1 = arith.constant 0 : i32
    return %c0_i32, %c0_i32_0 : i32, i32
  }
  func.func @transform_5(%arg0: i32) -> (i32, i32) {
    %c0_i32 = arith.constant 0 : i32
    %c0_i32_0 = arith.constant 0 : i32
    return %arg0, %c0_i32 : i32, i32
  }
  func.func @transform_6(%arg0: i32) -> (i32, i32) {
    %c0_i32 = arith.constant 0 : i32
    %c0_i32_0 = arith.constant 0 : i32
    return %arg0, %c0_i32 : i32, i32
  }
}

module attributes {stable_mosaic.version = 11 : i64} {
  func.func @_block_tail_kernel(%arg0: memref<128x576xf32, #tpu.memory_space<vmem>>, %arg1: memref<576x64xbf16, #tpu.memory_space<vmem>>, %arg2: memref<1x64xf32, #tpu.memory_space<vmem>>, %arg3: memref<8x128xf32, #tpu.memory_space<vmem>>, %arg4: memref<128x8xf32, #tpu.memory_space<vmem>>, %arg5: memref<64x128xbf16, #tpu.memory_space<vmem>>, %arg6: memref<1x128xf32, #tpu.memory_space<vmem>>, %arg7: memref<128x64xbf16, #tpu.memory_space<vmem>>, %arg8: memref<1x64xf32, #tpu.memory_space<vmem>>, %arg9: memref<1x64xf32, #tpu.memory_space<vmem>>, %arg10: memref<1x64xf32, #tpu.memory_space<vmem>>, %arg11: memref<64x64xbf16, #tpu.memory_space<vmem>>, %arg12: memref<1x64xf32, #tpu.memory_space<vmem>>, %arg13: memref<128x32xf32, #tpu.memory_space<vmem>>, %arg14: memref<32x64xbf16, #tpu.memory_space<vmem>>, %arg15: memref<1x64xf32, #tpu.memory_space<vmem>>, %arg16: memref<128x64xf32, #tpu.memory_space<vmem>>) attributes {dimension_semantics = [], scalar_prefetch = 0 : i64, scratch_operands = 0 : i64, tpu.core_type = #tpu.core_type<tc>} {
    %c0 = arith.constant 0 : index
    %c0_0 = arith.constant 0 : index
    %0 = vector.load %arg0[%c0, %c0_0] : memref<128x576xf32, #tpu.memory_space<vmem>>, vector<128x576xf32>
    %1 = arith.truncf %0 : vector<128x576xf32> to vector<128x576xbf16>
    %c0_1 = arith.constant 0 : index
    %c0_2 = arith.constant 0 : index
    %2 = vector.load %arg1[%c0_1, %c0_2] : memref<576x64xbf16, #tpu.memory_space<vmem>>, vector<576x64xbf16>
    %cst = arith.constant dense<0.000000e+00> : vector<128x64xf32>
    %3 = tpu.matmul %1, %2, %cst {dimension_numbers = #tpu.dot_dimension_numbers<[1], [0], [0], [1], [0, 0, 1, 1], [], []>} : vector<128x576xbf16>, vector<576x64xbf16>, vector<128x64xf32> -> vector<128x64xf32>
    %c0_3 = arith.constant 0 : index
    %c0_4 = arith.constant 0 : index
    %4 = vector.load %arg2[%c0_3, %c0_4] : memref<1x64xf32, #tpu.memory_space<vmem>>, vector<1x64xf32>
    %5 = vector.broadcast %4 : vector<1x64xf32> to vector<128x64xf32>
    %6 = arith.addf %3, %5 : vector<128x64xf32>
    %c0_5 = arith.constant 0 : index
    %c0_6 = arith.constant 0 : index
    %7 = vector.load %arg3[%c0_5, %c0_6] : memref<8x128xf32, #tpu.memory_space<vmem>>, vector<8x128xf32>
    %cst_7 = arith.constant dense<0.000000e+00> : vector<8x64xf32>
    %8 = tpu.matmul %7, %6, %cst_7 {dimension_numbers = #tpu.dot_dimension_numbers<[1], [0], [0], [1], [0, 0, 1, 1], [], []>} : vector<8x128xf32>, vector<128x64xf32>, vector<8x64xf32> -> vector<8x64xf32>
    %9 = arith.truncf %8 : vector<8x64xf32> to vector<8x64xbf16>
    %c0_8 = arith.constant 0 : index
    %c0_9 = arith.constant 0 : index
    %10 = vector.load %arg5[%c0_8, %c0_9] : memref<64x128xbf16, #tpu.memory_space<vmem>>, vector<64x128xbf16>
    %cst_10 = arith.constant dense<0.000000e+00> : vector<8x128xf32>
    %11 = tpu.matmul %9, %10, %cst_10 {dimension_numbers = #tpu.dot_dimension_numbers<[1], [0], [0], [1], [0, 0, 1, 1], [], []>} : vector<8x64xbf16>, vector<64x128xbf16>, vector<8x128xf32> -> vector<8x128xf32>
    %c0_11 = arith.constant 0 : index
    %c0_12 = arith.constant 0 : index
    %12 = vector.load %arg6[%c0_11, %c0_12] : memref<1x128xf32, #tpu.memory_space<vmem>>, vector<1x128xf32>
    %13 = vector.broadcast %12 : vector<1x128xf32> to vector<8x128xf32>
    %14 = arith.addf %11, %13 : vector<8x128xf32>
    %cst_13 = arith.constant 0.000000e+00 : f32
    %15 = vector.broadcast %cst_13 : f32 to vector<8x128xf32>
    %16 = arith.maximumf %14, %15 : vector<8x128xf32>
    %17 = arith.truncf %16 : vector<8x128xf32> to vector<8x128xbf16>
    %c0_14 = arith.constant 0 : index
    %c0_15 = arith.constant 0 : index
    %18 = vector.load %arg7[%c0_14, %c0_15] : memref<128x64xbf16, #tpu.memory_space<vmem>>, vector<128x64xbf16>
    %cst_16 = arith.constant dense<0.000000e+00> : vector<8x64xf32>
    %19 = tpu.matmul %17, %18, %cst_16 {dimension_numbers = #tpu.dot_dimension_numbers<[1], [0], [0], [1], [0, 0, 1, 1], [], []>} : vector<8x128xbf16>, vector<128x64xbf16>, vector<8x64xf32> -> vector<8x64xf32>
    %c0_17 = arith.constant 0 : index
    %c0_18 = arith.constant 0 : index
    %20 = vector.load %arg10[%c0_17, %c0_18] : memref<1x64xf32, #tpu.memory_space<vmem>>, vector<1x64xf32>
    %21 = vector.broadcast %20 : vector<1x64xf32> to vector<8x64xf32>
    %22 = arith.addf %19, %21 : vector<8x64xf32>
    %cst_19 = arith.constant 0.000000e+00 : f32
    %23 = vector.broadcast %cst_19 : f32 to vector<8x64xf32>
    %24 = arith.subf %23, %22 : vector<8x64xf32>
    %25 = math.exp %24 : vector<8x64xf32>
    %cst_20 = arith.constant 1.000000e+00 : f32
    %26 = vector.broadcast %cst_20 : f32 to vector<8x64xf32>
    %27 = arith.addf %26, %25 : vector<8x64xf32>
    %cst_21 = arith.constant 1.000000e+00 : f32
    %28 = vector.broadcast %cst_21 : f32 to vector<8x64xf32>
    %29 = arith.divf %28, %27 : vector<8x64xf32>
    %c0_22 = arith.constant 0 : index
    %c0_23 = arith.constant 0 : index
    %30 = vector.load %arg4[%c0_22, %c0_23] : memref<128x8xf32, #tpu.memory_space<vmem>>, vector<128x8xf32>
    %c0_24 = arith.constant 0 : index
    %c0_25 = arith.constant 0 : index
    %31 = vector.load %arg8[%c0_24, %c0_25] : memref<1x64xf32, #tpu.memory_space<vmem>>, vector<1x64xf32>
    %32 = vector.broadcast %31 : vector<1x64xf32> to vector<8x64xf32>
    %33 = arith.mulf %29, %32 : vector<8x64xf32>
    %cst_26 = arith.constant dense<0.000000e+00> : vector<128x64xf32>
    %34 = tpu.matmul %30, %33, %cst_26 {dimension_numbers = #tpu.dot_dimension_numbers<[1], [0], [0], [1], [0, 0, 1, 1], [], []>} : vector<128x8xf32>, vector<8x64xf32>, vector<128x64xf32> -> vector<128x64xf32>
    %35 = arith.mulf %6, %34 : vector<128x64xf32>
    %c0_27 = arith.constant 0 : index
    %c0_28 = arith.constant 0 : index
    %36 = vector.load %arg9[%c0_27, %c0_28] : memref<1x64xf32, #tpu.memory_space<vmem>>, vector<1x64xf32>
    %37 = vector.broadcast %36 : vector<1x64xf32> to vector<128x64xf32>
    %38 = arith.addf %35, %37 : vector<128x64xf32>
    %cst_29 = arith.constant 0.000000e+00 : f32
    %39 = vector.broadcast %cst_29 : f32 to vector<128x64xf32>
    %40 = arith.maximumf %38, %39 : vector<128x64xf32>
    %41 = arith.truncf %40 : vector<128x64xf32> to vector<128x64xbf16>
    %c0_30 = arith.constant 0 : index
    %c0_31 = arith.constant 0 : index
    %42 = vector.load %arg11[%c0_30, %c0_31] : memref<64x64xbf16, #tpu.memory_space<vmem>>, vector<64x64xbf16>
    %cst_32 = arith.constant dense<0.000000e+00> : vector<128x64xf32>
    %43 = tpu.matmul %41, %42, %cst_32 {dimension_numbers = #tpu.dot_dimension_numbers<[1], [0], [0], [1], [0, 0, 1, 1], [], []>} : vector<128x64xbf16>, vector<64x64xbf16>, vector<128x64xf32> -> vector<128x64xf32>
    %c0_33 = arith.constant 0 : index
    %c0_34 = arith.constant 0 : index
    %44 = vector.load %arg12[%c0_33, %c0_34] : memref<1x64xf32, #tpu.memory_space<vmem>>, vector<1x64xf32>
    %45 = vector.broadcast %44 : vector<1x64xf32> to vector<128x64xf32>
    %46 = arith.addf %43, %45 : vector<128x64xf32>
    %c0_35 = arith.constant 0 : index
    %c0_36 = arith.constant 0 : index
    %47 = vector.load %arg13[%c0_35, %c0_36] : memref<128x32xf32, #tpu.memory_space<vmem>>, vector<128x32xf32>
    %48 = arith.truncf %47 : vector<128x32xf32> to vector<128x32xbf16>
    %c0_37 = arith.constant 0 : index
    %c0_38 = arith.constant 0 : index
    %49 = vector.load %arg14[%c0_37, %c0_38] : memref<32x64xbf16, #tpu.memory_space<vmem>>, vector<32x64xbf16>
    %cst_39 = arith.constant dense<0.000000e+00> : vector<128x64xf32>
    %50 = tpu.matmul %48, %49, %cst_39 {dimension_numbers = #tpu.dot_dimension_numbers<[1], [0], [0], [1], [0, 0, 1, 1], [], []>} : vector<128x32xbf16>, vector<32x64xbf16>, vector<128x64xf32> -> vector<128x64xf32>
    %c0_40 = arith.constant 0 : index
    %c0_41 = arith.constant 0 : index
    %51 = vector.load %arg15[%c0_40, %c0_41] : memref<1x64xf32, #tpu.memory_space<vmem>>, vector<1x64xf32>
    %52 = vector.broadcast %51 : vector<1x64xf32> to vector<128x64xf32>
    %53 = arith.addf %50, %52 : vector<128x64xf32>
    %54 = arith.addf %46, %53 : vector<128x64xf32>
    %c0_42 = arith.constant 0 : index
    %c0_43 = arith.constant 0 : index
    %55 = vector.load %arg16[%c0_42, %c0_43] : memref<128x64xf32, #tpu.memory_space<vmem>>, vector<128x64xf32>
    tpu.vector_store %arg16[%c0_42, %c0_43], %54 {strides = array<i32>} : memref<128x64xf32, #tpu.memory_space<vmem>>, vector<128x64xf32>,
    return
  }
}

</mosaic_0001>

<llo_original>
// kernel: prebottleneck_forward.2
$region0: #{prebottleneck_forward.2}
  #allocation0 [shape = 'u32[]', space=smem, size = 0x4, offset = 0x4, fixed_abs, tag = 'smem constant byte address 0x4 - core index']
  #allocation1 [shape = 'u32[144,128]{1,0:T(1,128)}', space=vmem, size = 0x12000, scoped, tag = 'internal scratch']
  %s0 = inlined_call_operand.vmem [shape: f32[512,32], index: 0, kind: input, shape index: {}]
  %s1 = inlined_call_operand.vmem [shape: f32[1,32], index: 1, kind: input, shape index: {}]
  %s2 = inlined_call_operand.vmem [shape: f32[1,32], index: 2, kind: input, shape index: {}]
  %s3 = inlined_call_operand.vmem [shape: bf16[32,64], index: 3, kind: input, shape index: {}]
  %s4 = inlined_call_operand.vmem [shape: f32[1,64], index: 4, kind: input, shape index: {}]
  %s5 = inlined_call_operand.vmem [shape: f32[512,32], index: 5, kind: output, shape index: {0}]
  %s6 = inlined_call_operand.vmem [shape: f32[512,64], index: 6, kind: output, shape index: {1}]
  %7 = xla_tuple %s5, %s6
  %s8 = sld [smem:[#allocation0]]
  $region61: #{prebottleneck_forward.2} parent=0
    _
  %s10 = ssub.s32 1, %s8
  %s11 = scalar_select 0, %s10, %s8
  loop: start=0, step=1, limit=6
  $region2: #{prebottleneck_forward.2} parent=0 // loop_pre_header
    _
  $region3: #{prebottleneck_forward.2} parent=0 // loop_header
    %s13 = sphi 0, %s17
    %p14 = scmp.ge.s32.totalorder %s13, 6
    %s23 = sphi 0, %s25
    %s26 = sphi 0, %s23
    %s27 = sphi 0, %s26
    %s43 = sphi 0, %s27
    %s47 = sphi 0, %s47
    %s49 = sphi 0, %s47
    %s50 = sphi 0, %s49
    %s64 = sphi 0, %s50
    %s68 = sphi 0, %s68
    %s70 = sphi 0, %s68
    %s71 = sphi 0, %s70
    %s85 = sphi 0, %s71
    %s89 = sphi 0, %s89
    %s91 = sphi 0, %s89
    %s92 = sphi 0, %s91
    %s106 = sphi 0, %s92
    %s110 = sphi 0, %s110
    %s112 = sphi 0, %s110
    %s113 = sphi 0, %s112
    %s127 = sphi 0, %s113
    %s133 = sphi 0, %s135
    %s136 = sphi 0, %s133
    %s137 = sphi 0, %s136
    %s153 = sphi 0, %s137
    %s159 = sphi 0, %s161
    %s162 = sphi 0, %s159
    %s163 = sphi 0, %s162
    %s179 = sphi 0, %s163
  $region4: #{prebottleneck_forward.2} parent=0 // loop_header_branch
    %16 = sbr.rel (%p14) target = $region8
  $region5: #{prebottleneck_forward.2} parent=0 // loop_body
    %s18 = ssub.s32 %s13, 1
    %s19 = ssub.s32 %s13, 2
    %s20 = sadd.s32 %s13, 1
    %s21 = ssub.s32 %s13, %s20
    %p22 = scmp.eq.s32.totalorder %s21, 0
    %s24 = sadd.s32 %s23, 1
    %s25 = scalar_select %p22, %s23, %s24
    %p28 = pneg %p22
    %p29 = scmp.eq.s32.totalorder %s13, 3
    %p30 = por %p28, %p29
    %p31 = scmp.ne.s32.totalorder %s23, %s26
    %p32 = scmp.eq.s32.totalorder %s13, 0
    %p33 = por %p31, %p32
    %p34 = scmp.ne.s32.totalorder %s23, %s26
    %p35 = scmp.eq.s32.totalorder %s18, 3
    %p36 = por %p34, %p35
    %p37 = scmp.ne.s32.totalorder %s26, %s27
    %p38 = scmp.eq.s32.totalorder %s18, 0
    %p39 = por %p37, %p38
    %p40 = scmp.ne.s32.totalorder %s26, %s27
    %p41 = scmp.eq.s32.totalorder %s19, 3
    %p42 = por %p40, %p41
    %p44 = scmp.ne.s32.totalorder %s27, %s43
    %p45 = scmp.eq.s32.totalorder %s19, 0
    %p46 = por %p44, %p45
    %s48 = sadd.s32 %s47, 1
    %p51 = scmp.eq.s32.totalorder %s13, 3
    %p52 = scmp.ne.s32.totalorder %s47, %s49
    %p53 = scmp.eq.s32.totalorder %s13, 0
    %p54 = por %p52, %p53
    %p55 = scmp.ne.s32.totalorder %s47, %s49
    %p56 = scmp.eq.s32.totalorder %s18, 3
    %p57 = por %p55, %p56
    %p58 = scmp.ne.s32.totalorder %s49, %s50
    %p59 = scmp.eq.s32.totalorder %s18, 0
    %p60 = por %p58, %p59
    %p61 = scmp.ne.s32.totalorder %s49, %s50
    %p62 = scmp.eq.s32.totalorder %s19, 3
    %p63 = por %p61, %p62
    %p65 = scmp.ne.s32.totalorder %s50, %s64
    %p66 = scmp.eq.s32.totalorder %s19, 0
    %p67 = por %p65, %p66
    %s69 = sadd.s32 %s68, 1
    %p72 = scmp.eq.s32.totalorder %s13, 3
    %p73 = scmp.ne.s32.totalorder %s68, %s70
    %p74 = scmp.eq.s32.totalorder %s13, 0
    %p75 = por %p73, %p74
    %p76 = scmp.ne.s32.totalorder %s68, %s70
    %p77 = scmp.eq.s32.totalorder %s18, 3
    %p78 = por %p76, %p77
    %p79 = scmp.ne.s32.totalorder %s70, %s71
    %p80 = scmp.eq.s32.totalorder %s18, 0
    %p81 = por %p79, %p80
    %p82 = scmp.ne.s32.totalorder %s70, %s71
    %p83 = scmp.eq.s32.totalorder %s19, 3
    %p84 = por %p82, %p83
    %p86 = scmp.ne.s32.totalorder %s71, %s85
    %p87 = scmp.eq.s32.totalorder %s19, 0
    %p88 = por %p86, %p87
    %s90 = sadd.s32 %s89, 1
    %p93 = scmp.eq.s32.totalorder %s13, 3
    %p94 = scmp.ne.s32.totalorder %s89, %s91
    %p95 = scmp.eq.s32.totalorder %s13, 0
    %p96 = por %p94, %p95
    %p97 = scmp.ne.s32.totalorder %s89, %s91
    %p98 = scmp.eq.s32.totalorder %s18, 3
    %p99 = por %p97, %p98
    %p100 = scmp.ne.s32.totalorder %s91, %s92
    %p101 = scmp.eq.s32.totalorder %s18, 0
    %p102 = por %p100, %p101
    %p103 = scmp.ne.s32.totalorder %s91, %s92
    %p104 = scmp.eq.s32.totalorder %s19, 3
    %p105 = por %p103, %p104
    %p107 = scmp.ne.s32.totalorder %s92, %s106
    %p108 = scmp.eq.s32.totalorder %s19, 0
    %p109 = por %p107, %p108
    %s111 = sadd.s32 %s110, 1
    %p114 = scmp.eq.s32.totalorder %s13, 3
    %p115 = scmp.ne.s32.totalorder %s110, %s112
    %p116 = scmp.eq.s32.totalorder %s13, 0
    %p117 = por %p115, %p116
    %p118 = scmp.ne.s32.totalorder %s110, %s112
    %p119 = scmp.eq.s32.totalorder %s18, 3
    %p120 = por %p118, %p119
    %p121 = scmp.ne.s32.totalorder %s112, %s113
    %p122 = scmp.eq.s32.totalorder %s18, 0
    %p123 = por %p121, %p122
    %p124 = scmp.ne.s32.totalorder %s112, %s113
    %p125 = scmp.eq.s32.totalorder %s19, 3
    %p126 = por %p124, %p125
    %p128 = scmp.ne.s32.totalorder %s113, %s127
    %p129 = scmp.eq.s32.totalorder %s19, 0
    %p130 = por %p128, %p129
    %s131 = ssub.s32 %s13, %s20
    %p132 = scmp.eq.s32.totalorder %s131, 0
    %s134 = sadd.s32 %s133, 1
    %s135 = scalar_select %p132, %s133, %s134
    %p138 = pneg %p132
    %p139 = scmp.eq.s32.totalorder %s13, 3
    %p140 = por %p138, %p139
    %p141 = scmp.ne.s32.totalorder %s133, %s136
    %p142 = scmp.eq.s32.totalorder %s13, 0
    %p143 = por %p141, %p142
    %p144 = scmp.ne.s32.totalorder %s133, %s136
    %p145 = scmp.eq.s32.totalorder %s18, 3
    %p146 = por %p144, %p145
    %p147 = scmp.ne.s32.totalorder %s136, %s137
    %p148 = scmp.eq.s32.totalorder %s18, 0
    %p149 = por %p147, %p148
    %p150 = scmp.ne.s32.totalorder %s136, %s137
    %p151 = scmp.eq.s32.totalorder %s19, 3
    %p152 = por %p150, %p151
    %p154 = scmp.ne.s32.totalorder %s137, %s153
    %p155 = scmp.eq.s32.totalorder %s19, 0
    %p156 = por %p154, %p155
    %s157 = ssub.s32 %s13, %s20
    %p158 = scmp.eq.s32.totalorder %s157, 0
    %s160 = sadd.s32 %s159, 1
    %s161 = scalar_select %p158, %s159, %s160
    %p164 = pneg %p158
    %p165 = scmp.eq.s32.totalorder %s13, 3
    %p166 = por %p164, %p165
    %p167 = scmp.ne.s32.totalorder %s159, %s162
    %p168 = scmp.eq.s32.totalorder %s13, 0
    %p169 = por %p167, %p168
    %p170 = scmp.ne.s32.totalorder %s159, %s162
    %p171 = scmp.eq.s32.totalorder %s18, 3
    %p172 = por %p170, %p171
    %p173 = scmp.ne.s32.totalorder %s162, %s163
    %p174 = scmp.eq.s32.totalorder %s18, 0
    %p175 = por %p173, %p174
    %p176 = scmp.ne.s32.totalorder %s162, %s163
    %p177 = scmp.eq.s32.totalorder %s19, 3
    %p178 = por %p176, %p177
    %p180 = scmp.ne.s32.totalorder %s163, %s179
    %p181 = scmp.eq.s32.totalorder %s19, 0
    %p182 = por %p180, %p181
    %p183 = scmp.le.s32.totalorder 1, %s13
    %p184 = scmp.lt.s32.totalorder %s13, 5
    %p185 = pnand %p183, %p184
    %p186 = pneg %p185
    // Predicated region
    $region9: #{prebottleneck_forward.2} parent=5 // pred_check
      _
    $region10: #{prebottleneck_forward.2} parent=5 // pred_check_branch
      %188 = sbr.rel (%p185) target = $region12
    $region11: #{prebottleneck_forward.2} parent=5 // pred_region
      %s189 = ssub.s32 %s13, 1
      // Predicated region
      $region13: #{prebottleneck_forward.2} parent=11 // pred_check
        %p190 = pneg %p60
      $region14: #{prebottleneck_forward.2} parent=11 // pred_check_branch
        %192 = sbr.rel (%p190) target = $region16
      $region15: #{prebottleneck_forward.2} parent=11 // pred_region
        _
      $region16: #{prebottleneck_forward.2} parent=11 // pred_fallthru
        _
      // Predicated region
      $region17: #{prebottleneck_forward.2} parent=11 // pred_check
        %p193 = pneg %p81
      $region18: #{prebottleneck_forward.2} parent=11 // pred_check_branch
        %195 = sbr.rel (%p193) target = $region20
      $region19: #{prebottleneck_forward.2} parent=11 // pred_region
        _
      $region20: #{prebottleneck_forward.2} parent=11 // pred_fallthru
        _
      // Predicated region
      $region21: #{prebottleneck_forward.2} parent=11 // pred_check
        %p196 = pneg %p102
      $region22: #{prebottleneck_forward.2} parent=11 // pred_check_branch
        %198 = sbr.rel (%p196) target = $region24
      $region23: #{prebottleneck_forward.2} parent=11 // pred_region
        _
      $region24: #{prebottleneck_forward.2} parent=11 // pred_fallthru
        _
      // Predicated region
      $region25: #{prebottleneck_forward.2} parent=11 // pred_check
        %p199 = pneg %p123
      $region26: #{prebottleneck_forward.2} parent=11 // pred_check_branch
        %201 = sbr.rel (%p199) target = $region28
      $region27: #{prebottleneck_forward.2} parent=11 // pred_region
        _
      $region28: #{prebottleneck_forward.2} parent=11 // pred_fallthru
        _
    $region12: #{prebottleneck_forward.2} parent=5 // pred_fallthru
      _
    %p202 = scmp.lt.s32.totalorder %s13, 4
    // Predicated region
    $region29: #{prebottleneck_forward.2} parent=5 // pred_check
      %p203 = pneg %p202
    $region30: #{prebottleneck_forward.2} parent=5 // pred_check_branch
      %205 = sbr.rel (%p203) target = $region32
    $region31: #{prebottleneck_forward.2} parent=5 // pred_region
      // Predicated region
      $region33: #{prebottleneck_forward.2} parent=31 // pred_check
        %p206 = pneg %p33
      $region34: #{prebottleneck_forward.2} parent=31 // pred_check_branch
        %208 = sbr.rel (%p206) target = $region36
      $region35: #{prebottleneck_forward.2} parent=31 // pred_region
        %s209 = smul.u32 16, %s13
        %p210 = scmp.lt.s32.totalorder %s209, 63
        %s211 = scalar_select %p210, %s209, 63
        %s212 = smul.addr %s211, 8
        %s213 = scalar_lea.vmem %s0, %s212
        %s214 = smul.u32 16, %s13
      $region36: #{prebottleneck_forward.2} parent=31 // pred_fallthru
        _
    $region32: #{prebottleneck_forward.2} parent=5 // pred_fallthru
      _
    %p215 = scmp.le.s32.totalorder 1, %s13
    %p216 = scmp.lt.s32.totalorder %s13, 5
    %p217 = pnand %p215, %p216
    %p218 = pneg %p217
    // Predicated region
    $region37: #{prebottleneck_forward.2} parent=5 // pred_check
      _
    $region38: #{prebottleneck_forward.2} parent=5 // pred_check_branch
      %220 = sbr.rel (%p217) target = $region40
    $region39: #{prebottleneck_forward.2} parent=5 // pred_region
      %s221 = ssub.s32 %s13, 1
      %s222 = smul.u32 16, %s18
      %p223 = scmp.lt.s32.totalorder %s222, 63
      %s224 = scalar_select %p223, %s222, 63
      %s225 = smul.addr %s224, 8
      %s226 = scalar_lea.vmem %s0, %s225
      %p227 = pneg %p39
      %p228 = pneg %p36
      %p229 = pneg %p60
      %p230 = pneg %p57
      %p231 = pneg %p81
      %p232 = pneg %p78
      %p233 = pneg %p102
      %p234 = pneg %p99
      %p235 = pneg %p123
      %p236 = pneg %p120
      %p237 = pneg %p149
      %p238 = pneg %p146
      %s239 = smul.u32 16, %s18
      %p240 = scmp.lt.s32.totalorder %s239, 63
      %s241 = scalar_select %p240, %s239, 63
      %s242 = smul.addr %s241, 8
      %s243 = scalar_lea.vmem %s5, %s242
      %p244 = pneg %p175
      %p245 = pneg %p172
      %s246 = smul.u32 16, %s18
      %p247 = scmp.lt.s32.totalorder %s246, 63
      %s248 = scalar_select %p247, %s246, 63
      %s249 = smul.addr %s248, 8
      %s250 = scalar_lea.vmem %s6, %s249
      %s251 = smul.u32 16, %s18
      %p252 = scmp.lt.s32.totalorder %s251, 63
      %s253 = scalar_select %p252, %s251, 63
      %s254 = smul.addr %s253, 8
      %s255 = scalar_lea.vmem %s0, %s254
      %s256 = smul.u32 16, %s18
      %s257 = smul.u32 16, %s18
      %p258 = scmp.lt.s32.totalorder %s257, 63
      %s259 = scalar_select %p258, %s257, 63
      %s260 = smul.addr %s259, 8
      %s261 = scalar_lea.vmem %s5, %s260
      %s262 = smul.u32 16, %s18
      %s263 = smul.u32 16, %s18
      %p264 = scmp.lt.s32.totalorder %s263, 63
      %s265 = scalar_select %p264, %s263, 63
      %s266 = smul.addr %s265, 8
      %s267 = scalar_lea.vmem %s6, %s266
      %s268 = smul.u32 16, %s18
      %v270 = vld [vmem:[%s255] sm:$0xff]
      %v271 = vld [vmem:[%s255 + $0x8] sm:$0xff]
      %v272 = vld [vmem:[%s255 + $0x10] sm:$0xff]
      %v273 = vld [vmem:[%s255 + $0x18] sm:$0xff]
      %v274 = vld [vmem:[%s255 + $0x20] sm:$0xff]
      %v275 = vld [vmem:[%s255 + $0x28] sm:$0xff]
      %v276 = vld [vmem:[%s255 + $0x30] sm:$0xff]
      %v277 = vld [vmem:[%s255 + $0x38] sm:$0xff]
      %v278 = vld [vmem:[%s255 + $0x40] sm:$0xff]
      %v279 = vld [vmem:[%s255 + $0x48] sm:$0xff]
      %v280 = vld [vmem:[%s255 + $0x50] sm:$0xff]
      %v281 = vld [vmem:[%s255 + $0x58] sm:$0xff]
      %v282 = vld [vmem:[%s255 + $0x60] sm:$0xff]
      %v283 = vld [vmem:[%s255 + $0x68] sm:$0xff]
      %v284 = vld [vmem:[%s255 + $0x70] sm:$0xff]
      %v285 = vld [vmem:[%s255 + $0x78] sm:$0xff]
      %v286 = vld [vmem:[%s1] sm:$0x1]
      %v288 = vlaneseq
      %v289 = vshrl.u32 %v288, 7
      %v290 = vsub.s32 0, %v289
      %v291 = vrot.slane %v286, %v290
      %v293 = vmul.f32 %v270, %v291
      %v294 = vmul.f32 %v271, %v291
      %v295 = vmul.f32 %v272, %v291
      %v296 = vmul.f32 %v273, %v291
      %v297 = vmul.f32 %v274, %v291
      %v298 = vmul.f32 %v275, %v291
      %v299 = vmul.f32 %v276, %v291
      %v300 = vmul.f32 %v277, %v291
      %v301 = vmul.f32 %v278, %v291
      %v302 = vmul.f32 %v279, %v291
      %v303 = vmul.f32 %v280, %v291
      %v304 = vmul.f32 %v281, %v291
      %v305 = vmul.f32 %v282, %v291
      %v306 = vmul.f32 %v283, %v291
      %v307 = vmul.f32 %v284, %v291
      %v308 = vmul.f32 %v285, %v291
      %v309 = vld [vmem:[%s2] sm:$0x1]
      %v311 = vlaneseq
      %v312 = vshrl.u32 %v311, 7
      %v313 = vsub.s32 0, %v312
      %v314 = vrot.slane %v309, %v313
      %v316 = vadd.f32 %v293, %v314
      %v317 = vadd.f32 %v294, %v314
      %v318 = vadd.f32 %v295, %v314
      %v319 = vadd.f32 %v296, %v314
      %v320 = vadd.f32 %v297, %v314
      %v321 = vadd.f32 %v298, %v314
      %v322 = vadd.f32 %v299, %v314
      %v323 = vadd.f32 %v300, %v314
      %v324 = vadd.f32 %v301, %v314
      %v325 = vadd.f32 %v302, %v314
      %v326 = vadd.f32 %v303, %v314
      %v327 = vadd.f32 %v304, %v314
      %v328 = vadd.f32 %v305, %v314
      %v329 = vadd.f32 %v306, %v314
      %v330 = vadd.f32 %v307, %v314
      %v331 = vadd.f32 %v308, %v314
      %v332 = vmax.f32 %v316, 0.0
      %v333 = vmax.f32 %v317, 0.0
      %v334 = vmax.f32 %v318, 0.0
      %v335 = vmax.f32 %v319, 0.0
      %v336 = vmax.f32 %v320, 0.0
      %v337 = vmax.f32 %v321, 0.0
      %v338 = vmax.f32 %v322, 0.0
      %v339 = vmax.f32 %v323, 0.0
      %v340 = vmax.f32 %v324, 0.0
      %v341 = vmax.f32 %v325, 0.0
      %v342 = vmax.f32 %v326, 0.0
      %v343 = vmax.f32 %v327, 0.0
      %v344 = vmax.f32 %v328, 0.0
      %v345 = vmax.f32 %v329, 0.0
      %v346 = vmax.f32 %v330, 0.0
      %v347 = vmax.f32 %v331, 0.0
      %vm348 = vcmask 261120
      %349 = vst.msk [vmem:[%s261] sm:$0xff] %vm348, %v332
      %350 = vst.msk [vmem:[%s261 + $0x8] sm:$0xff] %vm348, %v333
      %351 = vst.msk [vmem:[%s261 + $0x10] sm:$0xff] %vm348, %v334
      %352 = vst.msk [vmem:[%s261 + $0x18] sm:$0xff] %vm348, %v335
      %353 = vst.msk [vmem:[%s261 + $0x20] sm:$0xff] %vm348, %v336
      %354 = vst.msk [vmem:[%s261 + $0x28] sm:$0xff] %vm348, %v337
      %355 = vst.msk [vmem:[%s261 + $0x30] sm:$0xff] %vm348, %v338
      %356 = vst.msk [vmem:[%s261 + $0x38] sm:$0xff] %vm348, %v339
      %357 = vst.msk [vmem:[%s261 + $0x40] sm:$0xff] %vm348, %v340
      %358 = vst.msk [vmem:[%s261 + $0x48] sm:$0xff] %vm348, %v341
      %359 = vst.msk [vmem:[%s261 + $0x50] sm:$0xff] %vm348, %v342
      %360 = vst.msk [vmem:[%s261 + $0x58] sm:$0xff] %vm348, %v343
      %361 = vst.msk [vmem:[%s261 + $0x60] sm:$0xff] %vm348, %v344
      %362 = vst.msk [vmem:[%s261 + $0x68] sm:$0xff] %vm348, %v345
      %363 = vst.msk [vmem:[%s261 + $0x70] sm:$0xff] %vm348, %v346
      %364 = vst.msk [vmem:[%s261 + $0x78] sm:$0xff] %vm348, %v347
      %v365 = vpack.c.bf16 %v333, %v332
      %v366 = vpack.c.bf16 %v335, %v334
      %v367 = vpack.c.bf16 %v337, %v336
      %v368 = vpack.c.bf16 %v339, %v338
      %v369 = vpack.c.bf16 %v341, %v340
      %v370 = vpack.c.bf16 %v343, %v342
      %v371 = vpack.c.bf16 %v345, %v344
      %v372 = vpack.c.bf16 %v347, %v346
      %v373 = vld [vmem:[%s3] sm:$0xf]
      %v374 = vld [vmem:[%s3 + $0x4] sm:$0xf]
      %v375 = vld [vmem:[%s3 + $0x8] sm:$0xf]
      %v376 = vld [vmem:[%s3 + $0xc] sm:$0xf]
      %v377 = vld [vmem:[%s4] sm:$0x1]
      %v379 = vlaneseq
      %v380 = vshrl.u32 %v379, 7
      %v381 = vsub.s32 0, %v380
      %v382 = vrot.slane %v377, %v381
      %v388 = vunpack.c.l.b16 %v373
      %v389 = vunpack.c.l.b16 %v374
      %v390 = vunpack.c.l.b16 %v375
      %v391 = vunpack.c.l.b16 %v376
      %v392 = vpack.c.b16 %v389, %v388
      %v393 = vpack.c.b16 %v391, %v390
      %v397 = vsel %vm348, %v365, 0
      %v400 = vsel %vm348, %v366, 0
      %v403 = vsel %vm348, %v367, 0
      %v406 = vsel %vm348, %v368, 0
      %v409 = vsel %vm348, %v369, 0
      %v412 = vsel %vm348, %v370, 0
      %v415 = vsel %vm348, %v371, 0
      %v418 = vsel %vm348, %v372, 0
      %420 = vmatprep.subr.bf16.mxu0 0
      %421 = vmatpush1.bf16.msra.mxu0 %v392
      %422 = vmatprep.subr.bf16.mxu0 0
      %423 = vmatpush1.bf16.msra.mxu0 %v393
      %424 = vmatprep.subr.bf16.mxu0 0
      %425 = vmatpush1.bf16.msra.mxu0 0
      %426 = vmatprep.subr.bf16.mxu0 0
      %427 = vmatpush1.bf16.msra.mxu0 0
      %428 = vmatprep.subr.bf16.mxu0 0
      %429 = vmatpush1.bf16.msra.mxu0 0
      %430 = vmatprep.subr.bf16.mxu0 0
      %431 = vmatpush1.bf16.msra.mxu0 0
      %432 = vmatprep.subr.bf16.mxu0 0
      %433 = vmatpush1.bf16.msra.mxu0 0
      %434 = vmatprep.subr.bf16.mxu0 0
      %435 = vmatpush1.bf16.msra.mxu0 0
      %436 = vmatprep.subr.bf16.mxu0 0
      %437 = vmatpush1.bf16.msra.mxu0 0
      %438 = vmatprep.subr.bf16.mxu0 0
      %439 = vmatpush1.bf16.msra.mxu0 0
      %440 = vmatprep.subr.bf16.mxu0 0
      %441 = vmatpush1.bf16.msra.mxu0 0
      %442 = vmatprep.subr.bf16.mxu0 0
      %443 = vmatpush1.bf16.msra.mxu0 0
      %444 = vmatprep.subr.bf16.mxu0 0
      %445 = vmatpush1.bf16.msra.mxu0 0
      %446 = vmatprep.subr.bf16.mxu0 0
      %447 = vmatpush1.bf16.msra.mxu0 0
      %448 = vmatprep.subr.bf16.mxu0 0
      %449 = vmatpush1.bf16.msra.mxu0 0
      %450 = vmatprep.subr.bf16.mxu0 0
      %451 = vmatpush1.bf16.msra.mxu0 0
      %452 = vmatprep.mubr.bf16.mxu0 0
      %453 = vmatmul.mubr.bf16.gmra.mrb[0].mxu0 %v397
      %v454 = vpop.f32.mrb[0].mxu0
      %v455 = vadd.f32 %v382, %v454
      %v456 = vpop.f32.mrb[0].mxu0
      %v457 = vpop.f32.mrb[0].mxu0
      %v458 = vadd.f32 %v382, %v457
      %v459 = vpop.f32.mrb[0].mxu0
      %460 = vmatprep.mubr.bf16.mxu0 0
      %461 = vmatmul.mubr.bf16.gmra.mrb[0].mxu0 %v400
      %v462 = vpop.f32.mrb[0].mxu0
      %v463 = vadd.f32 %v382, %v462
      %v464 = vpop.f32.mrb[0].mxu0
      %v465 = vpop.f32.mrb[0].mxu0
      %v466 = vadd.f32 %v382, %v465
      %v467 = vpop.f32.mrb[0].mxu0
      %468 = vmatprep.mubr.bf16.mxu0 0
      %469 = vmatmul.mubr.bf16.gmra.mrb[0].mxu0 %v403
      %v470 = vpop.f32.mrb[0].mxu0
      %v471 = vadd.f32 %v382, %v470
      %v472 = vpop.f32.mrb[0].mxu0
      %v473 = vpop.f32.mrb[0].mxu0
      %v474 = vadd.f32 %v382, %v473
      %v475 = vpop.f32.mrb[0].mxu0
      %476 = vmatprep.mubr.bf16.mxu0 0
      %477 = vmatmul.mubr.bf16.gmra.mrb[0].mxu0 %v406
      %v478 = vpop.f32.mrb[0].mxu0
      %v479 = vadd.f32 %v382, %v478
      %v480 = vpop.f32.mrb[0].mxu0
      %v481 = vpop.f32.mrb[0].mxu0
      %v482 = vadd.f32 %v382, %v481
      %v483 = vpop.f32.mrb[0].mxu0
      %484 = vmatprep.mubr.bf16.mxu0 0
      %485 = vmatmul.mubr.bf16.gmra.mrb[0].mxu0 %v409
      %v486 = vpop.f32.mrb[0].mxu0
      %v487 = vadd.f32 %v382, %v486
      %v488 = vpop.f32.mrb[0].mxu0
      %v489 = vpop.f32.mrb[0].mxu0
      %v490 = vadd.f32 %v382, %v489
      %v491 = vpop.f32.mrb[0].mxu0
      %492 = vmatprep.mubr.bf16.mxu0 0
      %493 = vmatmul.mubr.bf16.gmra.mrb[0].mxu0 %v412
      %v494 = vpop.f32.mrb[0].mxu0
      %v495 = vadd.f32 %v382, %v494
      %v496 = vpop.f32.mrb[0].mxu0
      %v497 = vpop.f32.mrb[0].mxu0
      %v498 = vadd.f32 %v382, %v497
      %v499 = vpop.f32.mrb[0].mxu0
      %500 = vmatprep.mubr.bf16.mxu0 0
      %501 = vmatmul.mubr.bf16.gmra.mrb[0].mxu0 %v415
      %v502 = vpop.f32.mrb[0].mxu0
      %v503 = vadd.f32 %v382, %v502
      %v504 = vpop.f32.mrb[0].mxu0
      %v505 = vpop.f32.mrb[0].mxu0
      %v506 = vadd.f32 %v382, %v505
      %v507 = vpop.f32.mrb[0].mxu0
      %508 = vmatprep.mubr.bf16.mxu0 0
      %509 = vmatmul.mubr.bf16.gmra.mrb[0].mxu0 %v418
      %v510 = vpop.f32.mrb[0].mxu0
      %v511 = vadd.f32 %v382, %v510
      %v512 = vpop.f32.mrb[0].mxu0
      %v513 = vpop.f32.mrb[0].mxu0
      %v514 = vadd.f32 %v382, %v513
      %v515 = vpop.f32.mrb[0].mxu0
      %516 = vdwg.mxu0
      %v517 = vmax.f32 %v455, 0.0
      %v518 = vmax.f32 %v458, 0.0
      %v519 = vmax.f32 %v463, 0.0
      %v520 = vmax.f32 %v466, 0.0
      %v521 = vmax.f32 %v471, 0.0
      %v522 = vmax.f32 %v474, 0.0
      %v523 = vmax.f32 %v479, 0.0
      %v524 = vmax.f32 %v482, 0.0
      %v525 = vmax.f32 %v487, 0.0
      %v526 = vmax.f32 %v490, 0.0
      %v527 = vmax.f32 %v495, 0.0
      %v528 = vmax.f32 %v498, 0.0
      %v529 = vmax.f32 %v503, 0.0
      %v530 = vmax.f32 %v506, 0.0
      %v531 = vmax.f32 %v511, 0.0
      %v532 = vmax.f32 %v514, 0.0
      %vm533 = vcmask 523264
      %534 = vst.msk [vmem:[%s267] sm:$0xff] %vm533, %v517
      %535 = vst.msk [vmem:[%s267 + $0x8] sm:$0xff] %vm533, %v518
      %536 = vst.msk [vmem:[%s267 + $0x10] sm:$0xff] %vm533, %v519
      %537 = vst.msk [vmem:[%s267 + $0x18] sm:$0xff] %vm533, %v520
      %538 = vst.msk [vmem:[%s267 + $0x20] sm:$0xff] %vm533, %v521
      %539 = vst.msk [vmem:[%s267 + $0x28] sm:$0xff] %vm533, %v522
      %540 = vst.msk [vmem:[%s267 + $0x30] sm:$0xff] %vm533, %v523
      %541 = vst.msk [vmem:[%s267 + $0x38] sm:$0xff] %vm533, %v524
      %542 = vst.msk [vmem:[%s267 + $0x40] sm:$0xff] %vm533, %v525
      %543 = vst.msk [vmem:[%s267 + $0x48] sm:$0xff] %vm533, %v526
      %544 = vst.msk [vmem:[%s267 + $0x50] sm:$0xff] %vm533, %v527
      %545 = vst.msk [vmem:[%s267 + $0x58] sm:$0xff] %vm533, %v528
      %546 = vst.msk [vmem:[%s267 + $0x60] sm:$0xff] %vm533, %v529
      %547 = vst.msk [vmem:[%s267 + $0x68] sm:$0xff] %vm533, %v530
      %548 = vst.msk [vmem:[%s267 + $0x70] sm:$0xff] %vm533, %v531
      %549 = vst.msk [vmem:[%s267 + $0x78] sm:$0xff] %vm533, %v532
      %s550 = smul.u32 16, %s18
      %p551 = scmp.lt.s32.totalorder %s550, 63
      %s552 = scalar_select %p551, %s550, 63
      %s553 = smul.addr %s552, 8
      %s554 = scalar_lea.vmem %s5, %s553
      %s555 = smul.u32 16, %s18
      %p556 = scmp.lt.s32.totalorder %s555, 63
      %s557 = scalar_select %p556, %s555, 63
      %s558 = smul.addr %s557, 8
      %s559 = scalar_lea.vmem %s6, %s558
      // Predicated region
      $region41: #{prebottleneck_forward.2} parent=39 // pred_check
        %p560 = pneg %p146
      $region42: #{prebottleneck_forward.2} parent=39 // pred_check_branch
        %562 = sbr.rel (%p560) target = $region44
      $region43: #{prebottleneck_forward.2} parent=39 // pred_region
        %s563 = smul.u32 16, %s18
      $region44: #{prebottleneck_forward.2} parent=39 // pred_fallthru
        _
      // Predicated region
      $region45: #{prebottleneck_forward.2} parent=39 // pred_check
        %p564 = pneg %p172
      $region46: #{prebottleneck_forward.2} parent=39 // pred_check_branch
        %566 = sbr.rel (%p564) target = $region48
      $region47: #{prebottleneck_forward.2} parent=39 // pred_region
        %s567 = smul.u32 16, %s18
      $region48: #{prebottleneck_forward.2} parent=39 // pred_fallthru
        _
    $region40: #{prebottleneck_forward.2} parent=5 // pred_fallthru
      _
    %p568 = scmp.le.s32.totalorder 2, %s13
    // Predicated region
    $region49: #{prebottleneck_forward.2} parent=5 // pred_check
      %p569 = pneg %p568
    $region50: #{prebottleneck_forward.2} parent=5 // pred_check_branch
      %571 = sbr.rel (%p569) target = $region52
    $region51: #{prebottleneck_forward.2} parent=5 // pred_region
      %s572 = ssub.s32 %s13, 2
      // Predicated region
      $region53: #{prebottleneck_forward.2} parent=51 // pred_check
        %p573 = pneg %p152
      $region54: #{prebottleneck_forward.2} parent=51 // pred_check_branch
        %575 = sbr.rel (%p573) target = $region56
      $region55: #{prebottleneck_forward.2} parent=51 // pred_region
        %s576 = smul.u32 16, %s19
        %p577 = scmp.lt.s32.totalorder %s576, 63
        %s578 = scalar_select %p577, %s576, 63
        %s579 = smul.addr %s578, 8
        %s580 = scalar_lea.vmem %s5, %s579
      $region56: #{prebottleneck_forward.2} parent=51 // pred_fallthru
        _
      // Predicated region
      $region57: #{prebottleneck_forward.2} parent=51 // pred_check
        %p581 = pneg %p178
      $region58: #{prebottleneck_forward.2} parent=51 // pred_check_branch
        %583 = sbr.rel (%p581) target = $region60
      $region59: #{prebottleneck_forward.2} parent=51 // pred_region
        %s584 = smul.u32 16, %s19
        %p585 = scmp.lt.s32.totalorder %s584, 63
        %s586 = scalar_select %p585, %s584, 63
        %s587 = smul.addr %s586, 8
        %s588 = scalar_lea.vmem %s6, %s587
      $region60: #{prebottleneck_forward.2} parent=51 // pred_fallthru
        _
    $region52: #{prebottleneck_forward.2} parent=5 // pred_fallthru
      _
  $region6: #{prebottleneck_forward.2} parent=0 // loop_footer
    %s17 = sadd.s32 1, %s13
  $region7: #{prebottleneck_forward.2} parent=0 // loop_footer_branch
    %12 = sbr.rel target = $region3
  $region8: #{prebottleneck_forward.2} parent=0 // loop_exit
    _

// kernel: prebottleneck_forward.3
$region0: #{prebottleneck_forward.3}
  #allocation0 [shape = 'u32[]', space=smem, size = 0x4, offset = 0x4, fixed_abs, tag = 'smem constant byte address 0x4 - core index']
  #allocation1 [shape = 'u32[144,128]{1,0:T(1,128)}', space=vmem, size = 0x12000, scoped, tag = 'internal scratch']
  %s0 = inlined_call_operand.vmem [shape: f32[128,576], index: 0, kind: input, shape index: {}]
  %s1 = inlined_call_operand.vmem [shape: bf16[576,64], index: 1, kind: input, shape index: {}]
  %s2 = inlined_call_operand.vmem [shape: f32[1,64], index: 2, kind: input, shape index: {}]
  %s3 = inlined_call_operand.vmem [shape: f32[8,128], index: 3, kind: input, shape index: {}]
  %s4 = inlined_call_operand.vmem [shape: f32[128,8], index: 4, kind: input, shape index: {}]
  %s5 = inlined_call_operand.vmem [shape: bf16[64,128], index: 5, kind: input, shape index: {}]
  %s6 = inlined_call_operand.vmem [shape: f32[1,128], index: 6, kind: input, shape index: {}]
  %s7 = inlined_call_operand.vmem [shape: bf16[128,64], index: 7, kind: input, shape index: {}]
  %s8 = inlined_call_operand.vmem [shape: f32[1,64], index: 8, kind: input, shape index: {}]
  %s9 = inlined_call_operand.vmem [shape: f32[1,64], index: 9, kind: input, shape index: {}]
  %s10 = inlined_call_operand.vmem [shape: f32[1,64], index: 10, kind: input, shape index: {}]
  %s11 = inlined_call_operand.vmem [shape: bf16[64,64], index: 11, kind: input, shape index: {}]
  %s12 = inlined_call_operand.vmem [shape: f32[1,64], index: 12, kind: input, shape index: {}]
  %s13 = inlined_call_operand.vmem [shape: f32[128,32], index: 13, kind: input, shape index: {}]
  %s14 = inlined_call_operand.vmem [shape: bf16[32,64], index: 14, kind: input, shape index: {}]
  %s15 = inlined_call_operand.vmem [shape: f32[1,64], index: 15, kind: input, shape index: {}]
  %s16 = inlined_call_operand.hbm [shape: f32[128,64], index: 16, kind: output, shape index: {}]
  %s17 = sld [smem:[#allocation0]]
  $region74: #{prebottleneck_forward.3} parent=0
    _
  %s19 = ssub.s32 1, %s17
  %s20 = scalar_select 0, %s19, %s17
  $region1: #{prebottleneck_forward.3} parent=0
    #allocation2 [shape = 'u8[65536]{0}', space=vmem, size = 0x10000, scoped, tag = 'output window, operand 0, single buffered']
    #allocation3 [shape = 's32[1]{0}', space=sflag, size = 0x4, scoped, tag = 'scoped memory for prebottleneck_forward.3']
    %21 = vsyncpa [#allocation3], 0
    // Predicated region
    $region2: #{prebottleneck_forward.3} parent=1 // pred_check
      _
    $region3: #{prebottleneck_forward.3} parent=1 // pred_check_branch
      %23 = sbr.rel (0) target = $region5
    $region4: #{prebottleneck_forward.3} parent=1 // pred_region
      _
    $region5: #{prebottleneck_forward.3} parent=1 // pred_fallthru
      _
    // Predicated region
    $region6: #{prebottleneck_forward.3} parent=1 // pred_check
      _
    $region7: #{prebottleneck_forward.3} parent=1 // pred_check_branch
      %25 = sbr.rel (0) target = $region9
    $region8: #{prebottleneck_forward.3} parent=1 // pred_region
      _
    $region9: #{prebottleneck_forward.3} parent=1 // pred_fallthru
      _
    // Predicated region
    $region10: #{prebottleneck_forward.3} parent=1 // pred_check
      _
    $region11: #{prebottleneck_forward.3} parent=1 // pred_check_branch
      %27 = sbr.rel (0) target = $region13
    $region12: #{prebottleneck_forward.3} parent=1 // pred_region
      _
    $region13: #{prebottleneck_forward.3} parent=1 // pred_fallthru
      _
    // Predicated region
    $region14: #{prebottleneck_forward.3} parent=1 // pred_check
      _
    $region15: #{prebottleneck_forward.3} parent=1 // pred_check_branch
      %29 = sbr.rel (0) target = $region17
    $region16: #{prebottleneck_forward.3} parent=1 // pred_region
      _
    $region17: #{prebottleneck_forward.3} parent=1 // pred_fallthru
      _
    // Predicated region
    $region18: #{prebottleneck_forward.3} parent=1 // pred_check
      _
    $region19: #{prebottleneck_forward.3} parent=1 // pred_check_branch
      %31 = sbr.rel (0) target = $region21
    $region20: #{prebottleneck_forward.3} parent=1 // pred_region
      _
    $region21: #{prebottleneck_forward.3} parent=1 // pred_fallthru
      _
    // Predicated region
    $region22: #{prebottleneck_forward.3} parent=1 // pred_check
      _
    $region23: #{prebottleneck_forward.3} parent=1 // pred_check_branch
      %33 = sbr.rel (0) target = $region25
    $region24: #{prebottleneck_forward.3} parent=1 // pred_region
      _
    $region25: #{prebottleneck_forward.3} parent=1 // pred_fallthru
      _
    // Predicated region
    $region26: #{prebottleneck_forward.3} parent=1 // pred_check
      _
    $region27: #{prebottleneck_forward.3} parent=1 // pred_check_branch
      %35 = sbr.rel (0) target = $region29
    $region28: #{prebottleneck_forward.3} parent=1 // pred_region
      _
    $region29: #{prebottleneck_forward.3} parent=1 // pred_fallthru
      _
    // Predicated region
    $region30: #{prebottleneck_forward.3} parent=1 // pred_check
      _
    $region31: #{prebottleneck_forward.3} parent=1 // pred_check_branch
      %37 = sbr.rel (0) target = $region33
    $region32: #{prebottleneck_forward.3} parent=1 // pred_region
      _
    $region33: #{prebottleneck_forward.3} parent=1 // pred_fallthru
      _
    // Predicated region
    $region34: #{prebottleneck_forward.3} parent=1 // pred_check
      _
    $region35: #{prebottleneck_forward.3} parent=1 // pred_check_branch
      %39 = sbr.rel (0) target = $region37
    $region36: #{prebottleneck_forward.3} parent=1 // pred_region
      _
    $region37: #{prebottleneck_forward.3} parent=1 // pred_fallthru
      _
    // Predicated region
    $region38: #{prebottleneck_forward.3} parent=1 // pred_check
      _
    $region39: #{prebottleneck_forward.3} parent=1 // pred_check_branch
      %41 = sbr.rel (0) target = $region41
    $region40: #{prebottleneck_forward.3} parent=1 // pred_region
      _
    $region41: #{prebottleneck_forward.3} parent=1 // pred_fallthru
      _
    // Predicated region
    $region42: #{prebottleneck_forward.3} parent=1 // pred_check
      _
    $region43: #{prebottleneck_forward.3} parent=1 // pred_check_branch
      %43 = sbr.rel (0) target = $region45
    $region44: #{prebottleneck_forward.3} parent=1 // pred_region
      _
    $region45: #{prebottleneck_forward.3} parent=1 // pred_fallthru
      _
    // Predicated region
    $region46: #{prebottleneck_forward.3} parent=1 // pred_check
      _
    $region47: #{prebottleneck_forward.3} parent=1 // pred_check_branch
      %45 = sbr.rel (0) target = $region49
    $region48: #{prebottleneck_forward.3} parent=1 // pred_region
      _
    $region49: #{prebottleneck_forward.3} parent=1 // pred_fallthru
      _
    // Predicated region
    $region50: #{prebottleneck_forward.3} parent=1 // pred_check
      _
    $region51: #{prebottleneck_forward.3} parent=1 // pred_check_branch
      %47 = sbr.rel (0) target = $region53
    $region52: #{prebottleneck_forward.3} parent=1 // pred_region
      _
    $region53: #{prebottleneck_forward.3} parent=1 // pred_fallthru
      _
    // Predicated region
    $region54: #{prebottleneck_forward.3} parent=1 // pred_check
      _
    $region55: #{prebottleneck_forward.3} parent=1 // pred_check_branch
      %49 = sbr.rel (0) target = $region57
    $region56: #{prebottleneck_forward.3} parent=1 // pred_region
      _
    $region57: #{prebottleneck_forward.3} parent=1 // pred_fallthru
      _
    // Predicated region
    $region58: #{prebottleneck_forward.3} parent=1 // pred_check
      _
    $region59: #{prebottleneck_forward.3} parent=1 // pred_check_branch
      %51 = sbr.rel (0) target = $region61
    $region60: #{prebottleneck_forward.3} parent=1 // pred_region
      _
    $region61: #{prebottleneck_forward.3} parent=1 // pred_fallthru
      _
    // Predicated region
    $region62: #{prebottleneck_forward.3} parent=1 // pred_check
      _
    $region63: #{prebottleneck_forward.3} parent=1 // pred_check_branch
      %53 = sbr.rel (0) target = $region65
    $region64: #{prebottleneck_forward.3} parent=1 // pred_region
      _
    $region65: #{prebottleneck_forward.3} parent=1 // pred_fallthru
      _
    %v55 = vld [vmem:[%s0] sm:$0xff]
    %v56 = vld [vmem:[%s0 + $0x8] sm:$0xff]
    %v57 = vld [vmem:[%s0 + $0x10] sm:$0xff]
    %v58 = vld [vmem:[%s0 + $0x18] sm:$0xff]
    %v59 = vld [vmem:[%s0 + $0x20] sm:$0xff]
    %v60 = vld [vmem:[%s0 + $0x28] sm:$0xff]
    %v61 = vld [vmem:[%s0 + $0x30] sm:$0xff]
    %v62 = vld [vmem:[%s0 + $0x38] sm:$0xff]
    %v63 = vld [vmem:[%s0 + $0x40] sm:$0xff]
    %v64 = vld [vmem:[%s0 + $0x48] sm:$0xff]
    %v65 = vld [vmem:[%s0 + $0x50] sm:$0xff]
    %v66 = vld [vmem:[%s0 + $0x58] sm:$0xff]
    %v67 = vld [vmem:[%s0 + $0x60] sm:$0xff]
    %v68 = vld [vmem:[%s0 + $0x68] sm:$0xff]
    %v69 = vld [vmem:[%s0 + $0x70] sm:$0xff]
    %v70 = vld [vmem:[%s0 + $0x78] sm:$0xff]
    %v71 = vld [vmem:[%s0 + $0x80] sm:$0xff]
    %v72 = vld [vmem:[%s0 + $0x88] sm:$0xff]
    %v73 = vld [vmem:[%s0 + $0x90] sm:$0xff]
    %v74 = vld [vmem:[%s0 + $0x98] sm:$0xff]
    %v75 = vld [vmem:[%s0 + $0xa0] sm:$0xff]
    %v76 = vld [vmem:[%s0 + $0xa8] sm:$0xff]
    %v77 = vld [vmem:[%s0 + $0xb0] sm:$0xff]
    %v78 = vld [vmem:[%s0 + $0xb8] sm:$0xff]
    %v79 = vld [vmem:[%s0 + $0xc0] sm:$0xff]
    %v80 = vld [vmem:[%s0 + $0xc8] sm:$0xff]
    %v81 = vld [vmem:[%s0 + $0xd0] sm:$0xff]
    %v82 = vld [vmem:[%s0 + $0xd8] sm:$0xff]
    %v83 = vld [vmem:[%s0 + $0xe0] sm:$0xff]
    %v84 = vld [vmem:[%s0 + $0xe8] sm:$0xff]
    %v85 = vld [vmem:[%s0 + $0xf0] sm:$0xff]
    %v86 = vld [vmem:[%s0 + $0xf8] sm:$0xff]
    %v87 = vld [vmem:[%s0 + $0x100] sm:$0xff]
    %v88 = vld [vmem:[%s0 + $0x108] sm:$0xff]
    %v89 = vld [vmem:[%s0 + $0x110] sm:$0xff]
    %v90 = vld [vmem:[%s0 + $0x118] sm:$0xff]
    %v91 = vld [vmem:[%s0 + $0x120] sm:$0xff]
    %v92 = vld [vmem:[%s0 + $0x128] sm:$0xff]
    %v93 = vld [vmem:[%s0 + $0x130] sm:$0xff]
    %v94 = vld [vmem:[%s0 + $0x138] sm:$0xff]
    %v95 = vld [vmem:[%s0 + $0x140] sm:$0xff]
    %v96 = vld [vmem:[%s0 + $0x148] sm:$0xff]
    %v97 = vld [vmem:[%s0 + $0x150] sm:$0xff]
    %v98 = vld [vmem:[%s0 + $0x158] sm:$0xff]
    %v99 = vld [vmem:[%s0 + $0x160] sm:$0xff]
    %v100 = vld [vmem:[%s0 + $0x168] sm:$0xff]
    %v101 = vld [vmem:[%s0 + $0x170] sm:$0xff]
    %v102 = vld [vmem:[%s0 + $0x178] sm:$0xff]
    %v103 = vld [vmem:[%s0 + $0x180] sm:$0xff]
    %v104 = vld [vmem:[%s0 + $0x188] sm:$0xff]
    %v105 = vld [vmem:[%s0 + $0x190] sm:$0xff]
    %v106 = vld [vmem:[%s0 + $0x198] sm:$0xff]
    %v107 = vld [vmem:[%s0 + $0x1a0] sm:$0xff]
    %v108 = vld [vmem:[%s0 + $0x1a8] sm:$0xff]
    %v109 = vld [vmem:[%s0 + $0x1b0] sm:$0xff]
    %v110 = vld [vmem:[%s0 + $0x1b8] sm:$0xff]
    %v111 = vld [vmem:[%s0 + $0x1c0] sm:$0xff]
    %v112 = vld [vmem:[%s0 + $0x1c8] sm:$0xff]
    %v113 = vld [vmem:[%s0 + $0x1d0] sm:$0xff]
    %v114 = vld [vmem:[%s0 + $0x1d8] sm:$0xff]
    %v115 = vld [vmem:[%s0 + $0x1e0] sm:$0xff]
    %v116 = vld [vmem:[%s0 + $0x1e8] sm:$0xff]
    %v117 = vld [vmem:[%s0 + $0x1f0] sm:$0xff]
    %v118 = vld [vmem:[%s0 + $0x1f8] sm:$0xff]
    %v119 = vld [vmem:[%s0 + $0x200] sm:$0xff]
    %v120 = vld [vmem:[%s0 + $0x208] sm:$0xff]
    %v121 = vld [vmem:[%s0 + $0x210] sm:$0xff]
    %v122 = vld [vmem:[%s0 + $0x218] sm:$0xff]
    %v123 = vld [vmem:[%s0 + $0x220] sm:$0xff]
    %v124 = vld [vmem:[%s0 + $0x228] sm:$0xff]
    %v125 = vld [vmem:[%s0 + $0x230] sm:$0xff]
    %v126 = vld [vmem:[%s0 + $0x238] sm:$0xff]
    %v127 = vld [vmem:[%s0 + $0x240] sm:$0xff]
    %v128 = vld [vmem:[%s0 + $0x248] sm:$0xff]
    %v129 = vld [vmem:[%s0 + $0x250] sm:$0xff]
    %v130 = vld [vmem:[%s0 + $0x258] sm:$0xff]
    %v131 = vld [vmem:[%s0 + $0x260] sm:$0xff]
    %v132 = vld [vmem:[%s0 + $0x268] sm:$0xff]
    %v133 = vld [vmem:[%s0 + $0x270] sm:$0xff]
    %v134 = vld [vmem:[%s0 + $0x278] sm:$0xff]
    %v135 = vpack.c.bf16 %v60, %v55
    %v136 = vpack.c.bf16 %v61, %v56
    %v137 = vpack.c.bf16 %v62, %v57
    %v138 = vpack.c.bf16 %v63, %v58
    %v139 = vpack.c.bf16 %v64, %v59
    %v140 = vpack.c.bf16 %v70, %v65
    %v141 = vpack.c.bf16 %v71, %v66
    %v142 = vpack.c.bf16 %v72, %v67
    %v143 = vpack.c.bf16 %v73, %v68
    %v144 = vpack.c.bf16 %v74, %v69
    %v145 = vpack.c.bf16 %v80, %v75
    %v146 = vpack.c.bf16 %v81, %v76
    %v147 = vpack.c.bf16 %v82, %v77
    %v148 = vpack.c.bf16 %v83, %v78
    %v149 = vpack.c.bf16 %v84, %v79
    %v150 = vpack.c.bf16 %v90, %v85
    %v151 = vpack.c.bf16 %v91, %v86
    %v152 = vpack.c.bf16 %v92, %v87
    %v153 = vpack.c.bf16 %v93, %v88
    %v154 = vpack.c.bf16 %v94, %v89
    %v155 = vpack.c.bf16 %v100, %v95
    %v156 = vpack.c.bf16 %v101, %v96
    %v157 = vpack.c.bf16 %v102, %v97
    %v158 = vpack.c.bf16 %v103, %v98
    %v159 = vpack.c.bf16 %v104, %v99
    %v160 = vpack.c.bf16 %v110, %v105
    %v161 = vpack.c.bf16 %v111, %v106
    %v162 = vpack.c.bf16 %v112, %v107
    %v163 = vpack.c.bf16 %v113, %v108
    %v164 = vpack.c.bf16 %v114, %v109
    %v165 = vpack.c.bf16 %v120, %v115
    %v166 = vpack.c.bf16 %v121, %v116
    %v167 = vpack.c.bf16 %v122, %v117
    %v168 = vpack.c.bf16 %v123, %v118
    %v169 = vpack.c.bf16 %v124, %v119
    %v170 = vpack.c.bf16 %v130, %v125
    %v171 = vpack.c.bf16 %v131, %v126
    %v172 = vpack.c.bf16 %v132, %v127
    %v173 = vpack.c.bf16 %v133, %v128
    %v174 = vpack.c.bf16 %v134, %v129
    %v175 = vld [vmem:[%s1] sm:$0xf]
    %v176 = vld [vmem:[%s1 + $0x4] sm:$0xf]
    %v177 = vld [vmem:[%s1 + $0x8] sm:$0xf]
    %v178 = vld [vmem:[%s1 + $0xc] sm:$0xf]
    %v179 = vld [vmem:[%s1 + $0x10] sm:$0xf]
    %v180 = vld [vmem:[%s1 + $0x14] sm:$0xf]
    %v181 = vld [vmem:[%s1 + $0x18] sm:$0xf]
    %v182 = vld [vmem:[%s1 + $0x1c] sm:$0xf]
    %v183 = vld [vmem:[%s1 + $0x20] sm:$0xf]
    %v184 = vld [vmem:[%s1 + $0x24] sm:$0xf]
    %v185 = vld [vmem:[%s1 + $0x28] sm:$0xf]
    %v186 = vld [vmem:[%s1 + $0x2c] sm:$0xf]
    %v187 = vld [vmem:[%s1 + $0x30] sm:$0xf]
    %v188 = vld [vmem:[%s1 + $0x34] sm:$0xf]
    %v189 = vld [vmem:[%s1 + $0x38] sm:$0xf]
    %v190 = vld [vmem:[%s1 + $0x3c] sm:$0xf]
    %v191 = vld [vmem:[%s1 + $0x40] sm:$0xf]
    %v192 = vld [vmem:[%s1 + $0x44] sm:$0xf]
    %v193 = vld [vmem:[%s1 + $0x48] sm:$0xf]
    %v194 = vld [vmem:[%s1 + $0x4c] sm:$0xf]
    %v195 = vld [vmem:[%s1 + $0x50] sm:$0xf]
    %v196 = vld [vmem:[%s1 + $0x54] sm:$0xf]
    %v197 = vld [vmem:[%s1 + $0x58] sm:$0xf]
    %v198 = vld [vmem:[%s1 + $0x5c] sm:$0xf]
    %v199 = vld [vmem:[%s1 + $0x60] sm:$0xf]
    %v200 = vld [vmem:[%s1 + $0x64] sm:$0xf]
    %v201 = vld [vmem:[%s1 + $0x68] sm:$0xf]
    %v202 = vld [vmem:[%s1 + $0x6c] sm:$0xf]
    %v203 = vld [vmem:[%s1 + $0x70] sm:$0xf]
    %v204 = vld [vmem:[%s1 + $0x74] sm:$0xf]
    %v205 = vld [vmem:[%s1 + $0x78] sm:$0xf]
    %v206 = vld [vmem:[%s1 + $0x7c] sm:$0xf]
    %v207 = vld [vmem:[%s1 + $0x80] sm:$0xf]
    %v208 = vld [vmem:[%s1 + $0x84] sm:$0xf]
    %v209 = vld [vmem:[%s1 + $0x88] sm:$0xf]
    %v210 = vld [vmem:[%s1 + $0x8c] sm:$0xf]
    %v211 = vld [vmem:[%s1 + $0x90] sm:$0xf]
    %v212 = vld [vmem:[%s1 + $0x94] sm:$0xf]
    %v213 = vld [vmem:[%s1 + $0x98] sm:$0xf]
    %v214 = vld [vmem:[%s1 + $0x9c] sm:$0xf]
    %v215 = vld [vmem:[%s1 + $0xa0] sm:$0xf]
    %v216 = vld [vmem:[%s1 + $0xa4] sm:$0xf]
    %v217 = vld [vmem:[%s1 + $0xa8] sm:$0xf]
    %v218 = vld [vmem:[%s1 + $0xac] sm:$0xf]
    %v219 = vld [vmem:[%s1 + $0xb0] sm:$0xf]
    %v220 = vld [vmem:[%s1 + $0xb4] sm:$0xf]
    %v221 = vld [vmem:[%s1 + $0xb8] sm:$0xf]
    %v222 = vld [vmem:[%s1 + $0xbc] sm:$0xf]
    %v223 = vld [vmem:[%s1 + $0xc0] sm:$0xf]
    %v224 = vld [vmem:[%s1 + $0xc4] sm:$0xf]
    %v225 = vld [vmem:[%s1 + $0xc8] sm:$0xf]
    %v226 = vld [vmem:[%s1 + $0xcc] sm:$0xf]
    %v227 = vld [vmem:[%s1 + $0xd0] sm:$0xf]
    %v228 = vld [vmem:[%s1 + $0xd4] sm:$0xf]
    %v229 = vld [vmem:[%s1 + $0xd8] sm:$0xf]
    %v230 = vld [vmem:[%s1 + $0xdc] sm:$0xf]
    %v231 = vld [vmem:[%s1 + $0xe0] sm:$0xf]
    %v232 = vld [vmem:[%s1 + $0xe4] sm:$0xf]
    %v233 = vld [vmem:[%s1 + $0xe8] sm:$0xf]
    %v234 = vld [vmem:[%s1 + $0xec] sm:$0xf]
    %v235 = vld [vmem:[%s1 + $0xf0] sm:$0xf]
    %v236 = vld [vmem:[%s1 + $0xf4] sm:$0xf]
    %v237 = vld [vmem:[%s1 + $0xf8] sm:$0xf]
    %v238 = vld [vmem:[%s1 + $0xfc] sm:$0xf]
    %v239 = vld [vmem:[%s1 + $0x100] sm:$0xf]
    %v240 = vld [vmem:[%s1 + $0x104] sm:$0xf]
    %v241 = vld [vmem:[%s1 + $0x108] sm:$0xf]
    %v242 = vld [vmem:[%s1 + $0x10c] sm:$0xf]
    %v243 = vld [vmem:[%s1 + $0x110] sm:$0xf]
    %v244 = vld [vmem:[%s1 + $0x114] sm:$0xf]
    %v245 = vld [vmem:[%s1 + $0x118] sm:$0xf]
    %v246 = vld [vmem:[%s1 + $0x11c] sm:$0xf]
    %v247 = vld [vmem:[%s2] sm:$0x1]
    %v249 = vlaneseq
    %v250 = vshrl.u32 %v249, 7
    %v251 = vsub.s32 0, %v250
    %v252 = vrot.slane %v247, %v251
    %v326 = vunpack.c.l.b16 %v175
    %v327 = vunpack.c.l.b16 %v176
    %v328 = vunpack.c.l.b16 %v177
    %v329 = vunpack.c.l.b16 %v178
    %v330 = vunpack.c.l.b16 %v179
    %v331 = vunpack.c.l.b16 %v180
    %v332 = vunpack.c.l.b16 %v181
    %v333 = vunpack.c.l.b16 %v182
    %v334 = vunpack.c.l.b16 %v183
    %v335 = vunpack.c.l.b16 %v184
    %v336 = vunpack.c.l.b16 %v185
    %v337 = vunpack.c.l.b16 %v186
    %v338 = vunpack.c.l.b16 %v187
    %v339 = vunpack.c.l.b16 %v188
    %v340 = vunpack.c.l.b16 %v189
    %v341 = vunpack.c.l.b16 %v190
    %v342 = vunpack.c.l.b16 %v191
    %v343 = vunpack.c.l.b16 %v192
    %v344 = vunpack.c.l.b16 %v193
    %v345 = vunpack.c.l.b16 %v194
    %v346 = vunpack.c.l.b16 %v195
    %v347 = vunpack.c.l.b16 %v196
    %v348 = vunpack.c.l.b16 %v197
    %v349 = vunpack.c.l.b16 %v198
    %v350 = vunpack.c.l.b16 %v199
    %v351 = vunpack.c.l.b16 %v200
    %v352 = vunpack.c.l.b16 %v201
    %v353 = vunpack.c.l.b16 %v202
    %v354 = vunpack.c.l.b16 %v203
    %v355 = vunpack.c.l.b16 %v204
    %v356 = vunpack.c.l.b16 %v205
    %v357 = vunpack.c.l.b16 %v206
    %v358 = vunpack.c.l.b16 %v207
    %v359 = vunpack.c.l.b16 %v208
    %v360 = vunpack.c.l.b16 %v209
    %v361 = vunpack.c.l.b16 %v210
    %v362 = vunpack.c.l.b16 %v211
    %v363 = vunpack.c.l.b16 %v212
    %v364 = vunpack.c.l.b16 %v213
    %v365 = vunpack.c.l.b16 %v214
    %v366 = vunpack.c.l.b16 %v215
    %v367 = vunpack.c.l.b16 %v216
    %v368 = vunpack.c.l.b16 %v217
    %v369 = vunpack.c.l.b16 %v218
    %v370 = vunpack.c.l.b16 %v219
    %v371 = vunpack.c.l.b16 %v220
    %v372 = vunpack.c.l.b16 %v221
    %v373 = vunpack.c.l.b16 %v222
    %v374 = vunpack.c.l.b16 %v223
    %v375 = vunpack.c.l.b16 %v224
    %v376 = vunpack.c.l.b16 %v225
    %v377 = vunpack.c.l.b16 %v226
    %v378 = vunpack.c.l.b16 %v227
    %v379 = vunpack.c.l.b16 %v228
    %v380 = vunpack.c.l.b16 %v229
    %v381 = vunpack.c.l.b16 %v230
    %v382 = vunpack.c.l.b16 %v231
    %v383 = vunpack.c.l.b16 %v232
    %v384 = vunpack.c.l.b16 %v233
    %v385 = vunpack.c.l.b16 %v234
    %v386 = vunpack.c.l.b16 %v235
    %v387 = vunpack.c.l.b16 %v236
    %v388 = vunpack.c.l.b16 %v237
    %v389 = vunpack.c.l.b16 %v238
    %v390 = vunpack.c.l.b16 %v239
    %v391 = vunpack.c.l.b16 %v240
    %v392 = vunpack.c.l.b16 %v241
    %v393 = vunpack.c.l.b16 %v242
    %v394 = vunpack.c.l.b16 %v243
    %v395 = vunpack.c.l.b16 %v244
    %v396 = vunpack.c.l.b16 %v245
    %v397 = vunpack.c.l.b16 %v246
    %v398 = vpack.c.b16 %v327, %v326
    %v399 = vpack.c.b16 %v329, %v328
    %v400 = vpack.c.b16 %v331, %v330
    %v401 = vpack.c.b16 %v333, %v332
    %v402 = vpack.c.b16 %v335, %v334
    %v403 = vpack.c.b16 %v337, %v336
    %v404 = vpack.c.b16 %v339, %v338
    %v405 = vpack.c.b16 %v341, %v340
    %v406 = vpack.c.b16 %v343, %v342
    %v407 = vpack.c.b16 %v345, %v344
    %v408 = vpack.c.b16 %v347, %v346
    %v409 = vpack.c.b16 %v349, %v348
    %v410 = vpack.c.b16 %v351, %v350
    %v411 = vpack.c.b16 %v353, %v352
    %v412 = vpack.c.b16 %v355, %v354
    %v413 = vpack.c.b16 %v357, %v356
    %v414 = vpack.c.b16 %v359, %v358
    %v415 = vpack.c.b16 %v361, %v360
    %v416 = vpack.c.b16 %v363, %v362
    %v417 = vpack.c.b16 %v365, %v364
    %v418 = vpack.c.b16 %v367, %v366
    %v419 = vpack.c.b16 %v369, %v368
    %v420 = vpack.c.b16 %v371, %v370
    %v421 = vpack.c.b16 %v373, %v372
    %v422 = vpack.c.b16 %v375, %v374
    %v423 = vpack.c.b16 %v377, %v376
    %v424 = vpack.c.b16 %v379, %v378
    %v425 = vpack.c.b16 %v381, %v380
    %v426 = vpack.c.b16 %v383, %v382
    %v427 = vpack.c.b16 %v385, %v384
    %v428 = vpack.c.b16 %v387, %v386
    %v429 = vpack.c.b16 %v389, %v388
    %v430 = vpack.c.b16 %v391, %v390
    %v431 = vpack.c.b16 %v393, %v392
    %v432 = vpack.c.b16 %v395, %v394
    %v433 = vpack.c.b16 %v397, %v396
    %vm470 = vcmask 523264
    %v472 = vsel %vm470, %v139, 0
    %v475 = vsel %vm470, %v144, 0
    %v478 = vsel %vm470, %v149, 0
    %v481 = vsel %vm470, %v154, 0
    %v484 = vsel %vm470, %v159, 0
    %v487 = vsel %vm470, %v164, 0
    %v490 = vsel %vm470, %v169, 0
    %v493 = vsel %vm470, %v174, 0
    %495 = vmatprep.subr.bf16.mxu0 0
    %496 = vmatpush1.bf16.msra.mxu0 %v398
    %497 = vmatprep.subr.bf16.mxu0 0
    %498 = vmatpush1.bf16.msra.mxu0 %v399
    %499 = vmatprep.subr.bf16.mxu0 0
    %500 = vmatpush1.bf16.msra.mxu0 %v400
    %501 = vmatprep.subr.bf16.mxu0 0
    %502 = vmatpush1.bf16.msra.mxu0 %v401
    %503 = vmatprep.subr.bf16.mxu0 0
    %504 = vmatpush1.bf16.msra.mxu0 %v402
    %505 = vmatprep.subr.bf16.mxu0 0
    %506 = vmatpush1.bf16.msra.mxu0 %v403
    %507 = vmatprep.subr.bf16.mxu0 0
    %508 = vmatpush1.bf16.msra.mxu0 %v404
    %509 = vmatprep.subr.bf16.mxu0 0
    %510 = vmatpush1.bf16.msra.mxu0 %v405
    %511 = vmatprep.subr.bf16.mxu0 0
    %512 = vmatpush1.bf16.msra.mxu0 %v406
    %513 = vmatprep.subr.bf16.mxu0 0
    %514 = vmatpush1.bf16.msra.mxu0 %v407
    %515 = vmatprep.subr.bf16.mxu0 0
    %516 = vmatpush1.bf16.msra.mxu0 %v408
    %517 = vmatprep.subr.bf16.mxu0 0
    %518 = vmatpush1.bf16.msra.mxu0 %v409
    %519 = vmatprep.subr.bf16.mxu0 0
    %520 = vmatpush1.bf16.msra.mxu0 %v410
    %521 = vmatprep.subr.bf16.mxu0 0
    %522 = vmatpush1.bf16.msra.mxu0 %v411
    %523 = vmatprep.subr.bf16.mxu0 0
    %524 = vmatpush1.bf16.msra.mxu0 %v412
    %525 = vmatprep.subr.bf16.mxu0 0
    %526 = vmatpush1.bf16.msra.mxu0 %v413
    %527 = vmatprep.mubr.bf16.mxu0 %v136
    %528 = vmatmul.mubr.bf16.gmra.mrb[0].mxu0 %v135
    %v529 = vpop.f32.mrb[0].mxu0
    %v530 = vadd.f32 %v252, %v529
    %v531 = vpop.f32.mrb[0].mxu0
    %v532 = vpop.f32.mrb[0].mxu0
    %v533 = vadd.f32 %v252, %v532
    %v534 = vpop.f32.mrb[0].mxu0
    %535 = vmatprep.mubr.bf16.mxu0 %v141
    %536 = vmatmul.mubr.bf16.gmra.mrb[0].mxu0 %v140
    %v537 = vpop.f32.mrb[0].mxu0
    %v538 = vadd.f32 %v252, %v537
    %v539 = vpop.f32.mrb[0].mxu0
    %v540 = vpop.f32.mrb[0].mxu0
    %v541 = vadd.f32 %v252, %v540
    %v542 = vpop.f32.mrb[0].mxu0
    %543 = vmatprep.mubr.bf16.mxu0 %v146
    %544 = vmatmul.mubr.bf16.gmra.mrb[0].mxu0 %v145
    %v545 = vpop.f32.mrb[0].mxu0
    %v546 = vadd.f32 %v252, %v545
    %v547 = vpop.f32.mrb[0].mxu0
    %v548 = vpop.f32.mrb[0].mxu0
    %v549 = vadd.f32 %v252, %v548
    %v550 = vpop.f32.mrb[0].mxu0
    %551 = vmatprep.mubr.bf16.mxu0 %v151
    %552 = vmatmul.mubr.bf16.gmra.mrb[0].mxu0 %v150
    %v553 = vpop.f32.mrb[0].mxu0
    %v554 = vadd.f32 %v252, %v553
    %v555 = vpop.f32.mrb[0].mxu0
    %v556 = vpop.f32.mrb[0].mxu0
    %v557 = vadd.f32 %v252, %v556
    %v558 = vpop.f32.mrb[0].mxu0
    %559 = vmatprep.mubr.bf16.mxu0 %v156
    %560 = vmatmul.mubr.bf16.gmra.mrb[0].mxu0 %v155
    %v561 = vpop.f32.mrb[0].mxu0
    %v562 = vadd.f32 %v252, %v561
    %v563 = vpop.f32.mrb[0].mxu0
    %v564 = vpop.f32.mrb[0].mxu0
    %v565 = vadd.f32 %v252, %v564
    %v566 = vpop.f32.mrb[0].mxu0
    %567 = vmatprep.mubr.bf16.mxu0 %v161
    %568 = vmatmul.mubr.bf16.gmra.mrb[0].mxu0 %v160
    %v569 = vpop.f32.mrb[0].mxu0
    %v570 = vadd.f32 %v252, %v569
    %v571 = vpop.f32.mrb[0].mxu0
    %v572 = vpop.f32.mrb[0].mxu0
    %v573 = vadd.f32 %v252, %v572
    %v574 = vpop.f32.mrb[0].mxu0
    %575 = vmatprep.mubr.bf16.mxu0 %v166
    %576 = vmatmul.mubr.bf16.gmra.mrb[0].mxu0 %v165
    %v577 = vpop.f32.mrb[0].mxu0
    %v578 = vadd.f32 %v252, %v577
    %v579 = vpop.f32.mrb[0].mxu0
    %v580 = vpop.f32.mrb[0].mxu0
    %v581 = vadd.f32 %v252, %v580
    %v582 = vpop.f32.mrb[0].mxu0
    %583 = vmatprep.mubr.bf16.mxu0 %v171
    %584 = vmatmul.mubr.bf16.gmra.mrb[0].mxu0 %v170
    %v585 = vpop.f32.mrb[0].mxu0
    %v586 = vadd.f32 %v252, %v585
    %v587 = vpop.f32.mrb[0].mxu0
    %v588 = vpop.f32.mrb[0].mxu0
    %v589 = vadd.f32 %v252, %v588
    %v590 = vpop.f32.mrb[0].mxu0
    %591 = vdwg.mxu0
    %592 = vmatprep.subr.bf16.mxu0 0
    %593 = vmatpush1.bf16.msra.mxu0 %v414
    %594 = vmatprep.subr.bf16.mxu0 0
    %595 = vmatpush1.bf16.msra.mxu0 %v415
    %596 = vmatprep.subr.bf16.mxu0 0
    %597 = vmatpush1.bf16.msra.mxu0 %v416
    %598 = vmatprep.subr.bf16.mxu0 0
    %599 = vmatpush1.bf16.msra.mxu0 %v417
    %600 = vmatprep.subr.bf16.mxu0 0
    %601 = vmatpush1.bf16.msra.mxu0 %v418
    %602 = vmatprep.subr.bf16.mxu0 0
    %603 = vmatpush1.bf16.msra.mxu0 %v419
    %604 = vmatprep.subr.bf16.mxu0 0
    %605 = vmatpush1.bf16.msra.mxu0 %v420
    %606 = vmatprep.subr.bf16.mxu0 0
    %607 = vmatpush1.bf16.msra.mxu0 %v421
    %608 = vmatprep.subr.bf16.mxu0 0
    %609 = vmatpush1.bf16.msra.mxu0 %v422
    %610 = vmatprep.subr.bf16.mxu0 0
    %611 = vmatpush1.bf16.msra.mxu0 %v423
    %612 = vmatprep.subr.bf16.mxu0 0
    %613 = vmatpush1.bf16.msra.mxu0 %v424
    %614 = vmatprep.subr.bf16.mxu0 0
    %615 = vmatpush1.bf16.msra.mxu0 %v425
    %616 = vmatprep.subr.bf16.mxu0 0
    %617 = vmatpush1.bf16.msra.mxu0 %v426
    %618 = vmatprep.subr.bf16.mxu0 0
    %619 = vmatpush1.bf16.msra.mxu0 %v427
    %620 = vmatprep.subr.bf16.mxu0 0
    %621 = vmatpush1.bf16.msra.mxu0 %v428
    %622 = vmatprep.subr.bf16.mxu0 0
    %623 = vmatpush1.bf16.msra.mxu0 %v429
    %624 = vmatprep.mubr.bf16.mxu0 %v138
    %625 = vmatmul.mubr.bf16.gmra.mrb[0].mxu0 %v137
    %v626 = vpop.f32.mrb[0].mxu0
    %v627 = vadd.f32 %v530, %v626
    %v628 = vpop.f32.mrb[0].mxu0
    %v629 = vpop.f32.mrb[0].mxu0
    %v630 = vadd.f32 %v533, %v629
    %v631 = vpop.f32.mrb[0].mxu0
    %632 = vmatprep.mubr.bf16.mxu0 %v143
    %633 = vmatmul.mubr.bf16.gmra.mrb[0].mxu0 %v142
    %v634 = vpop.f32.mrb[0].mxu0
    %v635 = vadd.f32 %v538, %v634
    %v636 = vpop.f32.mrb[0].mxu0
    %v637 = vpop.f32.mrb[0].mxu0
    %v638 = vadd.f32 %v541, %v637
    %v639 = vpop.f32.mrb[0].mxu0
    %640 = vmatprep.mubr.bf16.mxu0 %v148
    %641 = vmatmul.mubr.bf16.gmra.mrb[0].mxu0 %v147
    %v642 = vpop.f32.mrb[0].mxu0
    %v643 = vadd.f32 %v546, %v642
    %v644 = vpop.f32.mrb[0].mxu0
    %v645 = vpop.f32.mrb[0].mxu0
    %v646 = vadd.f32 %v549, %v645
    %v647 = vpop.f32.mrb[0].mxu0
    %648 = vmatprep.mubr.bf16.mxu0 %v153
    %649 = vmatmul.mubr.bf16.gmra.mrb[0].mxu0 %v152
    %v650 = vpop.f32.mrb[0].mxu0
    %v651 = vadd.f32 %v554, %v650
    %v652 = vpop.f32.mrb[0].mxu0
    %v653 = vpop.f32.mrb[0].mxu0
    %v654 = vadd.f32 %v557, %v653
    %v655 = vpop.f32.mrb[0].mxu0
    %656 = vmatprep.mubr.bf16.mxu0 %v158
    %657 = vmatmul.mubr.bf16.gmra.mrb[0].mxu0 %v157
    %v658 = vpop.f32.mrb[0].mxu0
    %v659 = vadd.f32 %v562, %v658
    %v660 = vpop.f32.mrb[0].mxu0
    %v661 = vpop.f32.mrb[0].mxu0
    %v662 = vadd.f32 %v565, %v661
    %v663 = vpop.f32.mrb[0].mxu0
    %664 = vmatprep.mubr.bf16.mxu0 %v163
    %665 = vmatmul.mubr.bf16.gmra.mrb[0].mxu0 %v162
    %v666 = vpop.f32.mrb[0].mxu0
    %v667 = vadd.f32 %v570, %v666
    %v668 = vpop.f32.mrb[0].mxu0
    %v669 = vpop.f32.mrb[0].mxu0
    %v670 = vadd.f32 %v573, %v669
    %v671 = vpop.f32.mrb[0].mxu0
    %672 = vmatprep.mubr.bf16.mxu0 %v168
    %673 = vmatmul.mubr.bf16.gmra.mrb[0].mxu0 %v167
    %v674 = vpop.f32.mrb[0].mxu0
    %v675 = vadd.f32 %v578, %v674
    %v676 = vpop.f32.mrb[0].mxu0
    %v677 = vpop.f32.mrb[0].mxu0
    %v678 = vadd.f32 %v581, %v677
    %v679 = vpop.f32.mrb[0].mxu0
    %680 = vmatprep.mubr.bf16.mxu0 %v173
    %681 = vmatmul.mubr.bf16.gmra.mrb[0].mxu0 %v172
    %v682 = vpop.f32.mrb[0].mxu0
    %v683 = vadd.f32 %v586, %v682
    %v684 = vpop.f32.mrb[0].mxu0
    %v685 = vpop.f32.mrb[0].mxu0
    %v686 = vadd.f32 %v589, %v685
    %v687 = vpop.f32.mrb[0].mxu0
    %688 = vdwg.mxu0
    %689 = vmatprep.subr.bf16.mxu0 0
    %690 = vmatpush1.bf16.msra.mxu0 %v430
    %691 = vmatprep.subr.bf16.mxu0 0
    %692 = vmatpush1.bf16.msra.mxu0 %v431
    %693 = vmatprep.subr.bf16.mxu0 0
    %694 = vmatpush1.bf16.msra.mxu0 %v432
    %695 = vmatprep.subr.bf16.mxu0 0
    %696 = vmatpush1.bf16.msra.mxu0 %v433
    %697 = vmatprep.subr.bf16.mxu0 0
    %698 = vmatpush1.bf16.msra.mxu0 0
    %699 = vmatprep.subr.bf16.mxu0 0
    %700 = vmatpush1.bf16.msra.mxu0 0
    %701 = vmatprep.subr.bf16.mxu0 0
    %702 = vmatpush1.bf16.msra.mxu0 0
    %703 = vmatprep.subr.bf16.mxu0 0
    %704 = vmatpush1.bf16.msra.mxu0 0
    %705 = vmatprep.subr.bf16.mxu0 0
    %706 = vmatpush1.bf16.msra.mxu0 0
    %707 = vmatprep.subr.bf16.mxu0 0
    %708 = vmatpush1.bf16.msra.mxu0 0
    %709 = vmatprep.subr.bf16.mxu0 0
    %710 = vmatpush1.bf16.msra.mxu0 0
    %711 = vmatprep.subr.bf16.mxu0 0
    %712 = vmatpush1.bf16.msra.mxu0 0
    %713 = vmatprep.subr.bf16.mxu0 0
    %714 = vmatpush1.bf16.msra.mxu0 0
    %715 = vmatprep.subr.bf16.mxu0 0
    %716 = vmatpush1.bf16.msra.mxu0 0
    %717 = vmatprep.subr.bf16.mxu0 0
    %718 = vmatpush1.bf16.msra.mxu0 0
    %719 = vmatprep.subr.bf16.mxu0 0
    %720 = vmatpush1.bf16.msra.mxu0 0
    %721 = vmatprep.mubr.bf16.mxu0 0
    %722 = vmatmul.mubr.bf16.gmra.mrb[0].mxu0 %v472
    %v723 = vpop.f32.mrb[0].mxu0
    %v724 = vadd.f32 %v627, %v723
    %v725 = vpop.f32.mrb[0].mxu0
    %v726 = vpop.f32.mrb[0].mxu0
    %v727 = vadd.f32 %v630, %v726
    %v728 = vpop.f32.mrb[0].mxu0
    %729 = vmatprep.mubr.bf16.mxu0 0
    %730 = vmatmul.mubr.bf16.gmra.mrb[0].mxu0 %v475
    %v731 = vpop.f32.mrb[0].mxu0
    %v732 = vadd.f32 %v635, %v731
    %v733 = vpop.f32.mrb[0].mxu0
    %v734 = vpop.f32.mrb[0].mxu0
    %v735 = vadd.f32 %v638, %v734
    %v736 = vpop.f32.mrb[0].mxu0
    %737 = vmatprep.mubr.bf16.mxu0 0
    %738 = vmatmul.mubr.bf16.gmra.mrb[0].mxu0 %v478
    %v739 = vpop.f32.mrb[0].mxu0
    %v740 = vadd.f32 %v643, %v739
    %v741 = vpop.f32.mrb[0].mxu0
    %v742 = vpop.f32.mrb[0].mxu0
    %v743 = vadd.f32 %v646, %v742
    %v744 = vpop.f32.mrb[0].mxu0
    %745 = vmatprep.mubr.bf16.mxu0 0
    %746 = vmatmul.mubr.bf16.gmra.mrb[0].mxu0 %v481
    %v747 = vpop.f32.mrb[0].mxu0
    %v748 = vadd.f32 %v651, %v747
    %v749 = vpop.f32.mrb[0].mxu0
    %v750 = vpop.f32.mrb[0].mxu0
    %v751 = vadd.f32 %v654, %v750
    %v752 = vpop.f32.mrb[0].mxu0
    %753 = vmatprep.mubr.bf16.mxu0 0
    %754 = vmatmul.mubr.bf16.gmra.mrb[0].mxu0 %v484
    %v755 = vpop.f32.mrb[0].mxu0
    %v756 = vadd.f32 %v659, %v755
    %v757 = vpop.f32.mrb[0].mxu0
    %v758 = vpop.f32.mrb[0].mxu0
    %v759 = vadd.f32 %v662, %v758
    %v760 = vpop.f32.mrb[0].mxu0
    %761 = vmatprep.mubr.bf16.mxu0 0
    %762 = vmatmul.mubr.bf16.gmra.mrb[0].mxu0 %v487
    %v763 = vpop.f32.mrb[0].mxu0
    %v764 = vadd.f32 %v667, %v763
    %v765 = vpop.f32.mrb[0].mxu0
    %v766 = vpop.f32.mrb[0].mxu0
    %v767 = vadd.f32 %v670, %v766
    %v768 = vpop.f32.mrb[0].mxu0
    %769 = vmatprep.mubr.bf16.mxu0 0
    %770 = vmatmul.mubr.bf16.gmra.mrb[0].mxu0 %v490
    %v771 = vpop.f32.mrb[0].mxu0
    %v772 = vadd.f32 %v675, %v771
    %v773 = vpop.f32.mrb[0].mxu0
    %v774 = vpop.f32.mrb[0].mxu0
    %v775 = vadd.f32 %v678, %v774
    %v776 = vpop.f32.mrb[0].mxu0
    %777 = vmatprep.mubr.bf16.mxu0 0
    %778 = vmatmul.mubr.bf16.gmra.mrb[0].mxu0 %v493
    %v779 = vpop.f32.mrb[0].mxu0
    %v780 = vadd.f32 %v683, %v779
    %v781 = vpop.f32.mrb[0].mxu0
    %v782 = vpop.f32.mrb[0].mxu0
    %v783 = vadd.f32 %v686, %v782
    %v784 = vpop.f32.mrb[0].mxu0
    %785 = vdwg.mxu0
    %v786 = vld [vmem:[%s3] sm:$0xff]
    %787 = vmatprep.subr.mxu0 0.0
    %788 = vmatpush1.msra.mxu0 %v724
    %789 = vmatprep.subr.mxu0 0.0
    %790 = vmatpush1.msra.mxu0 %v727
    %791 = vmatprep.subr.mxu0 0.0
    %792 = vmatpush1.msra.mxu0 %v732
    %793 = vmatprep.subr.mxu0 0.0
    %794 = vmatpush1.msra.mxu0 %v735
    %795 = vmatprep.subr.mxu0 0.0
    %796 = vmatpush1.msra.mxu0 %v740
    %797 = vmatprep.subr.mxu0 0.0
    %798 = vmatpush1.msra.mxu0 %v743
    %799 = vmatprep.subr.mxu0 0.0
    %800 = vmatpush1.msra.mxu0 %v748
    %801 = vmatprep.subr.mxu0 0.0
    %802 = vmatpush1.msra.mxu0 %v751
    %803 = vmatprep.subr.mxu0 0.0
    %804 = vmatpush1.msra.mxu0 %v756
    %805 = vmatprep.subr.mxu0 0.0
    %806 = vmatpush1.msra.mxu0 %v759
    %807 = vmatprep.subr.mxu0 0.0
    %808 = vmatpush1.msra.mxu0 %v764
    %809 = vmatprep.subr.mxu0 0.0
    %810 = vmatpush1.msra.mxu0 %v767
    %811 = vmatprep.subr.mxu0 0.0
    %812 = vmatpush1.msra.mxu0 %v772
    %813 = vmatprep.subr.mxu0 0.0
    %814 = vmatpush1.msra.mxu0 %v775
    %815 = vmatprep.subr.mxu0 0.0
    %816 = vmatpush1.msra.mxu0 %v780
    %817 = vmatprep.subr.mxu0 0.0
    %818 = vmatpush1.msra.mxu0 %v783
    %819 = vmatprep.subr.mxu0 0.0
    %820 = vmatpush1.msra.mxu0 0.0
    %821 = vmatprep.subr.mxu0 0.0
    %822 = vmatpush1.msra.mxu0 0.0
    %823 = vmatprep.subr.mxu0 0.0
    %824 = vmatpush1.msra.mxu0 0.0
    %825 = vmatprep.subr.mxu0 0.0
    %826 = vmatpush1.msra.mxu0 0.0
    %827 = vmatprep.subr.mxu0 0.0
    %828 = vmatpush1.msra.mxu0 0.0
    %829 = vmatprep.subr.mxu0 0.0
    %830 = vmatpush1.msra.mxu0 0.0
    %831 = vmatprep.subr.mxu0 0.0
    %832 = vmatpush1.msra.mxu0 0.0
    %833 = vmatprep.subr.mxu0 0.0
    %834 = vmatpush1.msra.mxu0 0.0
    %835 = vmatprep.subr.mxu0 0.0
    %836 = vmatpush1.msra.mxu0 0.0
    %837 = vmatprep.subr.mxu0 0.0
    %838 = vmatpush1.msra.mxu0 0.0
    %839 = vmatprep.subr.mxu0 0.0
    %840 = vmatpush1.msra.mxu0 0.0
    %841 = vmatprep.subr.mxu0 0.0
    %842 = vmatpush1.msra.mxu0 0.0
    %843 = vmatprep.subr.mxu0 0.0
    %844 = vmatpush1.msra.mxu0 0.0
    %845 = vmatprep.subr.mxu0 0.0
    %846 = vmatpush1.msra.mxu0 0.0
    %847 = vmatprep.subr.mxu0 0.0
    %848 = vmatpush1.msra.mxu0 0.0
    %849 = vmatprep.subr.mxu0 0.0
    %850 = vmatpush1.msra.mxu0 0.0
    %851 = vmatprep.mubr.f32.mxu0 0.0
    %852 = vmatmul.mubr.f32.gmra.mrb[0].mxu0 %v786
    %v853 = vpop.f32.mrb[0].mxu0
    %v854 = vadd.f32 0.0, %v853
    %v855 = vpop.f32.mrb[0].mxu0
    %856 = vdwg.mxu0
    %v857 = vpack.c.bf16 %v854, %v854
    %v858 = vld [vmem:[%s5] sm:$0xf]
    %v859 = vld [vmem:[%s5 + $0x4] sm:$0xf]
    %v860 = vld [vmem:[%s5 + $0x8] sm:$0xf]
    %v861 = vld [vmem:[%s5 + $0xc] sm:$0xf]
    %v862 = vld [vmem:[%s5 + $0x10] sm:$0xf]
    %v863 = vld [vmem:[%s5 + $0x14] sm:$0xf]
    %v864 = vld [vmem:[%s5 + $0x18] sm:$0xf]
    %v865 = vld [vmem:[%s5 + $0x1c] sm:$0xf]
    %v866 = vld [vmem:[%s6] sm:$0x1]
    %v868 = vlaneseq
    %v869 = vshrl.u32 %v868, 7
    %v870 = vsub.s32 0, %v869
    %v871 = vrot.slane %v866, %v870
    %v881 = vunpack.c.l.b16 %v858
    %v882 = vunpack.c.l.b16 %v859
    %v883 = vunpack.c.l.b16 %v860
    %v884 = vunpack.c.l.b16 %v861
    %v885 = vunpack.c.l.b16 %v862
    %v886 = vunpack.c.l.b16 %v863
    %v887 = vunpack.c.l.b16 %v864
    %v888 = vunpack.c.l.b16 %v865
    %v889 = vpack.c.b16 %v882, %v881
    %v890 = vpack.c.b16 %v884, %v883
    %v891 = vpack.c.b16 %v886, %v885
    %v892 = vpack.c.b16 %v888, %v887
    %v898 = vsel %vm470, %v857, 0
    %900 = vmatprep.subr.bf16.mxu0 0
    %901 = vmatpush1.bf16.msra.mxu0 %v889
    %902 = vmatprep.subr.bf16.mxu0 0
    %903 = vmatpush1.bf16.msra.mxu0 %v890
    %904 = vmatprep.subr.bf16.mxu0 0
    %905 = vmatpush1.bf16.msra.mxu0 %v891
    %906 = vmatprep.subr.bf16.mxu0 0
    %907 = vmatpush1.bf16.msra.mxu0 %v892
    %908 = vmatprep.subr.bf16.mxu0 0
    %909 = vmatpush1.bf16.msra.mxu0 0
    %910 = vmatprep.subr.bf16.mxu0 0
    %911 = vmatpush1.bf16.msra.mxu0 0
    %912 = vmatprep.subr.bf16.mxu0 0
    %913 = vmatpush1.bf16.msra.mxu0 0
    %914 = vmatprep.subr.bf16.mxu0 0
    %915 = vmatpush1.bf16.msra.mxu0 0
    %916 = vmatprep.subr.bf16.mxu0 0
    %917 = vmatpush1.bf16.msra.mxu0 0
    %918 = vmatprep.subr.bf16.mxu0 0
    %919 = vmatpush1.bf16.msra.mxu0 0
    %920 = vmatprep.subr.bf16.mxu0 0
    %921 = vmatpush1.bf16.msra.mxu0 0
    %922 = vmatprep.subr.bf16.mxu0 0
    %923 = vmatpush1.bf16.msra.mxu0 0
    %924 = vmatprep.subr.bf16.mxu0 0
    %925 = vmatpush1.bf16.msra.mxu0 0
    %926 = vmatprep.subr.bf16.mxu0 0
    %927 = vmatpush1.bf16.msra.mxu0 0
    %928 = vmatprep.subr.bf16.mxu0 0
    %929 = vmatpush1.bf16.msra.mxu0 0
    %930 = vmatprep.subr.bf16.mxu0 0
    %931 = vmatpush1.bf16.msra.mxu0 0
    %932 = vmatprep.mubr.bf16.mxu0 0
    %933 = vmatmul.mubr.bf16.gmra.mrb[0].mxu0 %v898
    %v934 = vpop.f32.mrb[0].mxu0
    %v935 = vadd.f32 %v871, %v934
    %v936 = vpop.f32.mrb[0].mxu0
    %v937 = vpop.f32.mrb[0].mxu0
    %v938 = vpop.f32.mrb[0].mxu0
    %939 = vdwg.mxu0
    %v940 = vmax.f32 %v935, 0.0
    %v941 = vpack.c.bf16 %v940, %v940
    %v942 = vld [vmem:[%s7] sm:$0xf]
    %v943 = vld [vmem:[%s7 + $0x4] sm:$0xf]
    %v944 = vld [vmem:[%s7 + $0x8] sm:$0xf]
    %v945 = vld [vmem:[%s7 + $0xc] sm:$0xf]
    %v946 = vld [vmem:[%s7 + $0x10] sm:$0xf]
    %v947 = vld [vmem:[%s7 + $0x14] sm:$0xf]
    %v948 = vld [vmem:[%s7 + $0x18] sm:$0xf]
    %v949 = vld [vmem:[%s7 + $0x1c] sm:$0xf]
    %v950 = vld [vmem:[%s7 + $0x20] sm:$0xf]
    %v951 = vld [vmem:[%s7 + $0x24] sm:$0xf]
    %v952 = vld [vmem:[%s7 + $0x28] sm:$0xf]
    %v953 = vld [vmem:[%s7 + $0x2c] sm:$0xf]
    %v954 = vld [vmem:[%s7 + $0x30] sm:$0xf]
    %v955 = vld [vmem:[%s7 + $0x34] sm:$0xf]
    %v956 = vld [vmem:[%s7 + $0x38] sm:$0xf]
    %v957 = vld [vmem:[%s7 + $0x3c] sm:$0xf]
    %v958 = vld [vmem:[%s10] sm:$0x1]
    %v960 = vlaneseq
    %v961 = vshrl.u32 %v960, 7
    %v962 = vsub.s32 0, %v961
    %v963 = vrot.slane %v958, %v962
    %v981 = vunpack.c.l.b16 %v942
    %v982 = vunpack.c.l.b16 %v943
    %v983 = vunpack.c.l.b16 %v944
    %v984 = vunpack.c.l.b16 %v945
    %v985 = vunpack.c.l.b16 %v946
    %v986 = vunpack.c.l.b16 %v947
    %v987 = vunpack.c.l.b16 %v948
    %v988 = vunpack.c.l.b16 %v949
    %v989 = vunpack.c.l.b16 %v950
    %v990 = vunpack.c.l.b16 %v951
    %v991 = vunpack.c.l.b16 %v952
    %v992 = vunpack.c.l.b16 %v953
    %v993 = vunpack.c.l.b16 %v954
    %v994 = vunpack.c.l.b16 %v955
    %v995 = vunpack.c.l.b16 %v956
    %v996 = vunpack.c.l.b16 %v957
    %v997 = vpack.c.b16 %v982, %v981
    %v998 = vpack.c.b16 %v984, %v983
    %v999 = vpack.c.b16 %v986, %v985
    %v1000 = vpack.c.b16 %v988, %v987
    %v1001 = vpack.c.b16 %v990, %v989
    %v1002 = vpack.c.b16 %v992, %v991
    %v1003 = vpack.c.b16 %v994, %v993
    %v1004 = vpack.c.b16 %v996, %v995
    %1013 = vmatprep.subr.bf16.mxu0 0
    %1014 = vmatpush1.bf16.msra.mxu0 %v997
    %1015 = vmatprep.subr.bf16.mxu0 0
    %1016 = vmatpush1.bf16.msra.mxu0 %v998
    %1017 = vmatprep.subr.bf16.mxu0 0
    %1018 = vmatpush1.bf16.msra.mxu0 %v999
    %1019 = vmatprep.subr.bf16.mxu0 0
    %1020 = vmatpush1.bf16.msra.mxu0 %v1000
    %1021 = vmatprep.subr.bf16.mxu0 0
    %1022 = vmatpush1.bf16.msra.mxu0 %v1001
    %1023 = vmatprep.subr.bf16.mxu0 0
    %1024 = vmatpush1.bf16.msra.mxu0 %v1002
    %1025 = vmatprep.subr.bf16.mxu0 0
    %1026 = vmatpush1.bf16.msra.mxu0 %v1003
    %1027 = vmatprep.subr.bf16.mxu0 0
    %1028 = vmatpush1.bf16.msra.mxu0 %v1004
    %1029 = vmatprep.subr.bf16.mxu0 0
    %1030 = vmatpush1.bf16.msra.mxu0 0
    %1031 = vmatprep.subr.bf16.mxu0 0
    %1032 = vmatpush1.bf16.msra.mxu0 0
    %1033 = vmatprep.subr.bf16.mxu0 0
    %1034 = vmatpush1.bf16.msra.mxu0 0
    %1035 = vmatprep.subr.bf16.mxu0 0
    %1036 = vmatpush1.bf16.msra.mxu0 0
    %1037 = vmatprep.subr.bf16.mxu0 0
    %1038 = vmatpush1.bf16.msra.mxu0 0
    %1039 = vmatprep.subr.bf16.mxu0 0
    %1040 = vmatpush1.bf16.msra.mxu0 0
    %1041 = vmatprep.subr.bf16.mxu0 0
    %1042 = vmatpush1.bf16.msra.mxu0 0
    %1043 = vmatprep.subr.bf16.mxu0 0
    %1044 = vmatpush1.bf16.msra.mxu0 0
    %1045 = vmatprep.mubr.bf16.mxu0 0
    %1046 = vmatmul.mubr.bf16.gmra.mrb[0].mxu0 %v941
    %v1047 = vpop.f32.mrb[0].mxu0
    %v1048 = vadd.f32 %v963, %v1047
    %v1049 = vpop.f32.mrb[0].mxu0
    %v1050 = vpop.f32.mrb[0].mxu0
    %v1051 = vpop.f32.mrb[0].mxu0
    %1052 = vdwg.mxu0
    %v1053 = vsub.f32 0.0, %v1048
    %v1054 = vmul.f32 %v1053, 1.442695
    %v1055 = vpow.pop %v1054
    %v1056 = vadd.f32 %v1055, 1.0
    %v1057 = vrcp.pop %v1056
    %v1058 = vmul.f32 1.0, %v1057
    %v1059 = vld [vmem:[%s4] sm:$0xff]
    %v1060 = vld [vmem:[%s4 + $0x8] sm:$0xff]
    %v1061 = vld [vmem:[%s4 + $0x10] sm:$0xff]
    %v1062 = vld [vmem:[%s4 + $0x18] sm:$0xff]
    %v1063 = vld [vmem:[%s4 + $0x20] sm:$0xff]
    %v1064 = vld [vmem:[%s4 + $0x28] sm:$0xff]
    %v1065 = vld [vmem:[%s4 + $0x30] sm:$0xff]
    %v1066 = vld [vmem:[%s4 + $0x38] sm:$0xff]
    %v1067 = vld [vmem:[%s4 + $0x40] sm:$0xff]
    %v1068 = vld [vmem:[%s4 + $0x48] sm:$0xff]
    %v1069 = vld [vmem:[%s4 + $0x50] sm:$0xff]
    %v1070 = vld [vmem:[%s4 + $0x58] sm:$0xff]
    %v1071 = vld [vmem:[%s4 + $0x60] sm:$0xff]
    %v1072 = vld [vmem:[%s4 + $0x68] sm:$0xff]
    %v1073 = vld [vmem:[%s4 + $0x70] sm:$0xff]
    %v1074 = vld [vmem:[%s4 + $0x78] sm:$0xff]
    %v1075 = vld [vmem:[%s8] sm:$0x1]
    %v1077 = vlaneseq
    %v1078 = vshrl.u32 %v1077, 7
    %v1079 = vsub.s32 0, %v1078
    %v1080 = vrot.slane %v1075, %v1079
    %v1082 = vmul.f32 %v1058, %v1080
    %vm1083 = vcmask 64512
    %v1085 = vsel %vm1083, %v1059, 0
    %v1088 = vsel %vm1083, %v1060, 0
    %v1091 = vsel %vm1083, %v1061, 0
    %v1094 = vsel %vm1083, %v1062, 0
    %v1097 = vsel %vm1083, %v1063, 0
    %v1100 = vsel %vm1083, %v1064, 0
    %v1103 = vsel %vm1083, %v1065, 0
    %v1106 = vsel %vm1083, %v1066, 0
    %v1109 = vsel %vm1083, %v1067, 0
    %v1112 = vsel %vm1083, %v1068, 0
    %v1115 = vsel %vm1083, %v1069, 0
    %v1118 = vsel %vm1083, %v1070, 0
    %v1121 = vsel %vm1083, %v1071, 0
    %v1124 = vsel %vm1083, %v1072, 0
    %v1127 = vsel %vm1083, %v1073, 0
    %v1130 = vsel %vm1083, %v1074, 0
    %1132 = vmatprep.subr.mxu0 0.0
    %1133 = vmatpush1.msra.mxu0 %v1082
    %1134 = vmatprep.subr.mxu0 0.0
    %1135 = vmatpush1.msra.mxu0 0.0
    %1136 = vmatprep.subr.mxu0 0.0
    %1137 = vmatpush1.msra.mxu0 0.0
    %1138 = vmatprep.subr.mxu0 0.0
    %1139 = vmatpush1.msra.mxu0 0.0
    %1140 = vmatprep.subr.mxu0 0.0
    %1141 = vmatpush1.msra.mxu0 0.0
    %1142 = vmatprep.subr.mxu0 0.0
    %1143 = vmatpush1.msra.mxu0 0.0
    %1144 = vmatprep.subr.mxu0 0.0
    %1145 = vmatpush1.msra.mxu0 0.0
    %1146 = vmatprep.subr.mxu0 0.0
    %1147 = vmatpush1.msra.mxu0 0.0
    %1148 = vmatprep.subr.mxu0 0.0
    %1149 = vmatpush1.msra.mxu0 0.0
    %1150 = vmatprep.subr.mxu0 0.0
    %1151 = vmatpush1.msra.mxu0 0.0
    %1152 = vmatprep.subr.mxu0 0.0
    %1153 = vmatpush1.msra.mxu0 0.0
    %1154 = vmatprep.subr.mxu0 0.0
    %1155 = vmatpush1.msra.mxu0 0.0
    %1156 = vmatprep.subr.mxu0 0.0
    %1157 = vmatpush1.msra.mxu0 0.0
    %1158 = vmatprep.subr.mxu0 0.0
    %1159 = vmatpush1.msra.mxu0 0.0
    %1160 = vmatprep.subr.mxu0 0.0
    %1161 = vmatpush1.msra.mxu0 0.0
    %1162 = vmatprep.subr.mxu0 0.0
    %1163 = vmatpush1.msra.mxu0 0.0
    %1164 = vmatprep.subr.mxu0 0.0
    %1165 = vmatpush1.msra.mxu0 0.0
    %1166 = vmatprep.subr.mxu0 0.0
    %1167 = vmatpush1.msra.mxu0 0.0
    %1168 = vmatprep.subr.mxu0 0.0
    %1169 = vmatpush1.msra.mxu0 0.0
    %1170 = vmatprep.subr.mxu0 0.0
    %1171 = vmatpush1.msra.mxu0 0.0
    %1172 = vmatprep.subr.mxu0 0.0
    %1173 = vmatpush1.msra.mxu0 0.0
    %1174 = vmatprep.subr.mxu0 0.0
    %1175 = vmatpush1.msra.mxu0 0.0
    %1176 = vmatprep.subr.mxu0 0.0
    %1177 = vmatpush1.msra.mxu0 0.0
    %1178 = vmatprep.subr.mxu0 0.0
    %1179 = vmatpush1.msra.mxu0 0.0
    %1180 = vmatprep.subr.mxu0 0.0
    %1181 = vmatpush1.msra.mxu0 0.0
    %1182 = vmatprep.subr.mxu0 0.0
    %1183 = vmatpush1.msra.mxu0 0.0
    %1184 = vmatprep.subr.mxu0 0.0
    %1185 = vmatpush1.msra.mxu0 0.0
    %1186 = vmatprep.subr.mxu0 0.0
    %1187 = vmatpush1.msra.mxu0 0.0
    %1188 = vmatprep.subr.mxu0 0.0
    %1189 = vmatpush1.msra.mxu0 0.0
    %1190 = vmatprep.subr.mxu0 0.0
    %1191 = vmatpush1.msra.mxu0 0.0
    %1192 = vmatprep.subr.mxu0 0.0
    %1193 = vmatpush1.msra.mxu0 0.0
    %1194 = vmatprep.subr.mxu0 0.0
    %1195 = vmatpush1.msra.mxu0 0.0
    %1196 = vmatprep.mubr.f32.mxu0 0.0
    %1197 = vmatmul.mubr.f32.gmra.mrb[0].mxu0 %v1085
    %v1198 = vpop.f32.mrb[0].mxu0
    %v1199 = vadd.f32 0.0, %v1198
    %v1200 = vpop.f32.mrb[0].mxu0
    %1201 = vmatprep.mubr.f32.mxu0 0.0
    %1202 = vmatmul.mubr.f32.gmra.mrb[0].mxu0 %v1088
    %v1203 = vpop.f32.mrb[0].mxu0
    %v1204 = vadd.f32 0.0, %v1203
    %v1205 = vpop.f32.mrb[0].mxu0
    %1206 = vmatprep.mubr.f32.mxu0 0.0
    %1207 = vmatmul.mubr.f32.gmra.mrb[0].mxu0 %v1091
    %v1208 = vpop.f32.mrb[0].mxu0
    %v1209 = vadd.f32 0.0, %v1208
    %v1210 = vpop.f32.mrb[0].mxu0
    %1211 = vmatprep.mubr.f32.mxu0 0.0
    %1212 = vmatmul.mubr.f32.gmra.mrb[0].mxu0 %v1094
    %v1213 = vpop.f32.mrb[0].mxu0
    %v1214 = vadd.f32 0.0, %v1213
    %v1215 = vpop.f32.mrb[0].mxu0
    %1216 = vmatprep.mubr.f32.mxu0 0.0
    %1217 = vmatmul.mubr.f32.gmra.mrb[0].mxu0 %v1097
    %v1218 = vpop.f32.mrb[0].mxu0
    %v1219 = vadd.f32 0.0, %v1218
    %v1220 = vpop.f32.mrb[0].mxu0
    %1221 = vmatprep.mubr.f32.mxu0 0.0
    %1222 = vmatmul.mubr.f32.gmra.mrb[0].mxu0 %v1100
    %v1223 = vpop.f32.mrb[0].mxu0
    %v1224 = vadd.f32 0.0, %v1223
    %v1225 = vpop.f32.mrb[0].mxu0
    %1226 = vmatprep.mubr.f32.mxu0 0.0
    %1227 = vmatmul.mubr.f32.gmra.mrb[0].mxu0 %v1103
    %v1228 = vpop.f32.mrb[0].mxu0
    %v1229 = vadd.f32 0.0, %v1228
    %v1230 = vpop.f32.mrb[0].mxu0
    %1231 = vmatprep.mubr.f32.mxu0 0.0
    %1232 = vmatmul.mubr.f32.gmra.mrb[0].mxu0 %v1106
    %v1233 = vpop.f32.mrb[0].mxu0
    %v1234 = vadd.f32 0.0, %v1233
    %v1235 = vpop.f32.mrb[0].mxu0
    %1236 = vmatprep.mubr.f32.mxu0 0.0
    %1237 = vmatmul.mubr.f32.gmra.mrb[0].mxu0 %v1109
    %v1238 = vpop.f32.mrb[0].mxu0
    %v1239 = vadd.f32 0.0, %v1238
    %v1240 = vpop.f32.mrb[0].mxu0
    %1241 = vmatprep.mubr.f32.mxu0 0.0
    %1242 = vmatmul.mubr.f32.gmra.mrb[0].mxu0 %v1112
    %v1243 = vpop.f32.mrb[0].mxu0
    %v1244 = vadd.f32 0.0, %v1243
    %v1245 = vpop.f32.mrb[0].mxu0
    %1246 = vmatprep.mubr.f32.mxu0 0.0
    %1247 = vmatmul.mubr.f32.gmra.mrb[0].mxu0 %v1115
    %v1248 = vpop.f32.mrb[0].mxu0
    %v1249 = vadd.f32 0.0, %v1248
    %v1250 = vpop.f32.mrb[0].mxu0
    %1251 = vmatprep.mubr.f32.mxu0 0.0
    %1252 = vmatmul.mubr.f32.gmra.mrb[0].mxu0 %v1118
    %v1253 = vpop.f32.mrb[0].mxu0
    %v1254 = vadd.f32 0.0, %v1253
    %v1255 = vpop.f32.mrb[0].mxu0
    %1256 = vmatprep.mubr.f32.mxu0 0.0
    %1257 = vmatmul.mubr.f32.gmra.mrb[0].mxu0 %v1121
    %v1258 = vpop.f32.mrb[0].mxu0
    %v1259 = vadd.f32 0.0, %v1258
    %v1260 = vpop.f32.mrb[0].mxu0
    %1261 = vmatprep.mubr.f32.mxu0 0.0
    %1262 = vmatmul.mubr.f32.gmra.mrb[0].mxu0 %v1124
    %v1263 = vpop.f32.mrb[0].mxu0
    %v1264 = vadd.f32 0.0, %v1263
    %v1265 = vpop.f32.mrb[0].mxu0
    %1266 = vmatprep.mubr.f32.mxu0 0.0
    %1267 = vmatmul.mubr.f32.gmra.mrb[0].mxu0 %v1127
    %v1268 = vpop.f32.mrb[0].mxu0
    %v1269 = vadd.f32 0.0, %v1268
    %v1270 = vpop.f32.mrb[0].mxu0
    %1271 = vmatprep.mubr.f32.mxu0 0.0
    %1272 = vmatmul.mubr.f32.gmra.mrb[0].mxu0 %v1130
    %v1273 = vpop.f32.mrb[0].mxu0
    %v1274 = vadd.f32 0.0, %v1273
    %v1275 = vpop.f32.mrb[0].mxu0
    %1276 = vdwg.mxu0
    %v1277 = vmul.f32 %v724, %v1199
    %v1278 = vmul.f32 %v727, %v1204
    %v1279 = vmul.f32 %v732, %v1209
    %v1280 = vmul.f32 %v735, %v1214
    %v1281 = vmul.f32 %v740, %v1219
    %v1282 = vmul.f32 %v743, %v1224
    %v1283 = vmul.f32 %v748, %v1229
    %v1284 = vmul.f32 %v751, %v1234
    %v1285 = vmul.f32 %v756, %v1239
    %v1286 = vmul.f32 %v759, %v1244
    %v1287 = vmul.f32 %v764, %v1249
    %v1288 = vmul.f32 %v767, %v1254
    %v1289 = vmul.f32 %v772, %v1259
    %v1290 = vmul.f32 %v775, %v1264
    %v1291 = vmul.f32 %v780, %v1269
    %v1292 = vmul.f32 %v783, %v1274
    %v1293 = vld [vmem:[%s9] sm:$0x1]
    %v1295 = vlaneseq
    %v1296 = vshrl.u32 %v1295, 7
    %v1297 = vsub.s32 0, %v1296
    %v1298 = vrot.slane %v1293, %v1297
    %v1300 = vadd.f32 %v1277, %v1298
    %v1301 = vadd.f32 %v1278, %v1298
    %v1302 = vadd.f32 %v1279, %v1298
    %v1303 = vadd.f32 %v1280, %v1298
    %v1304 = vadd.f32 %v1281, %v1298
    %v1305 = vadd.f32 %v1282, %v1298
    %v1306 = vadd.f32 %v1283, %v1298
    %v1307 = vadd.f32 %v1284, %v1298
    %v1308 = vadd.f32 %v1285, %v1298
    %v1309 = vadd.f32 %v1286, %v1298
    %v1310 = vadd.f32 %v1287, %v1298
    %v1311 = vadd.f32 %v1288, %v1298
    %v1312 = vadd.f32 %v1289, %v1298
    %v1313 = vadd.f32 %v1290, %v1298
    %v1314 = vadd.f32 %v1291, %v1298
    %v1315 = vadd.f32 %v1292, %v1298
    %v1316 = vmax.f32 %v1300, 0.0
    %v1317 = vmax.f32 %v1301, 0.0
    %v1318 = vmax.f32 %v1302, 0.0
    %v1319 = vmax.f32 %v1303, 0.0
    %v1320 = vmax.f32 %v1304, 0.0
    %v1321 = vmax.f32 %v1305, 0.0
    %v1322 = vmax.f32 %v1306, 0.0
    %v1323 = vmax.f32 %v1307, 0.0
    %v1324 = vmax.f32 %v1308, 0.0
    %v1325 = vmax.f32 %v1309, 0.0
    %v1326 = vmax.f32 %v1310, 0.0
    %v1327 = vmax.f32 %v1311, 0.0
    %v1328 = vmax.f32 %v1312, 0.0
    %v1329 = vmax.f32 %v1313, 0.0
    %v1330 = vmax.f32 %v1314, 0.0
    %v1331 = vmax.f32 %v1315, 0.0
    %v1332 = vpack.c.bf16 %v1317, %v1316
    %v1333 = vpack.c.bf16 %v1319, %v1318
    %v1334 = vpack.c.bf16 %v1321, %v1320
    %v1335 = vpack.c.bf16 %v1323, %v1322
    %v1336 = vpack.c.bf16 %v1325, %v1324
    %v1337 = vpack.c.bf16 %v1327, %v1326
    %v1338 = vpack.c.bf16 %v1329, %v1328
    %v1339 = vpack.c.bf16 %v1331, %v1330
    %v1340 = vld [vmem:[%s11] sm:$0xf]
    %v1341 = vld [vmem:[%s11 + $0x4] sm:$0xf]
    %v1342 = vld [vmem:[%s11 + $0x8] sm:$0xf]
    %v1343 = vld [vmem:[%s11 + $0xc] sm:$0xf]
    %v1344 = vld [vmem:[%s11 + $0x10] sm:$0xf]
    %v1345 = vld [vmem:[%s11 + $0x14] sm:$0xf]
    %v1346 = vld [vmem:[%s11 + $0x18] sm:$0xf]
    %v1347 = vld [vmem:[%s11 + $0x1c] sm:$0xf]
    %v1348 = vld [vmem:[%s12] sm:$0x1]
    %v1350 = vlaneseq
    %v1351 = vshrl.u32 %v1350, 7
    %v1352 = vsub.s32 0, %v1351
    %v1353 = vrot.slane %v1348, %v1352
    %v1363 = vunpack.c.l.b16 %v1340
    %v1364 = vunpack.c.l.b16 %v1341
    %v1365 = vunpack.c.l.b16 %v1342
    %v1366 = vunpack.c.l.b16 %v1343
    %v1367 = vunpack.c.l.b16 %v1344
    %v1368 = vunpack.c.l.b16 %v1345
    %v1369 = vunpack.c.l.b16 %v1346
    %v1370 = vunpack.c.l.b16 %v1347
    %v1371 = vpack.c.b16 %v1364, %v1363
    %v1372 = vpack.c.b16 %v1366, %v1365
    %v1373 = vpack.c.b16 %v1368, %v1367
    %v1374 = vpack.c.b16 %v1370, %v1369
    %v1380 = vsel %vm470, %v1332, 0
    %v1383 = vsel %vm470, %v1333, 0
    %v1386 = vsel %vm470, %v1334, 0
    %v1389 = vsel %vm470, %v1335, 0
    %v1392 = vsel %vm470, %v1336, 0
    %v1395 = vsel %vm470, %v1337, 0
    %v1398 = vsel %vm470, %v1338, 0
    %v1401 = vsel %vm470, %v1339, 0
    %1403 = vmatprep.subr.bf16.mxu0 0
    %1404 = vmatpush1.bf16.msra.mxu0 %v1371
    %1405 = vmatprep.subr.bf16.mxu0 0
    %1406 = vmatpush1.bf16.msra.mxu0 %v1372
    %1407 = vmatprep.subr.bf16.mxu0 0
    %1408 = vmatpush1.bf16.msra.mxu0 %v1373
    %1409 = vmatprep.subr.bf16.mxu0 0
    %1410 = vmatpush1.bf16.msra.mxu0 %v1374
    %1411 = vmatprep.subr.bf16.mxu0 0
    %1412 = vmatpush1.bf16.msra.mxu0 0
    %1413 = vmatprep.subr.bf16.mxu0 0
    %1414 = vmatpush1.bf16.msra.mxu0 0
    %1415 = vmatprep.subr.bf16.mxu0 0
    %1416 = vmatpush1.bf16.msra.mxu0 0
    %1417 = vmatprep.subr.bf16.mxu0 0
    %1418 = vmatpush1.bf16.msra.mxu0 0
    %1419 = vmatprep.subr.bf16.mxu0 0
    %1420 = vmatpush1.bf16.msra.mxu0 0
    %1421 = vmatprep.subr.bf16.mxu0 0
    %1422 = vmatpush1.bf16.msra.mxu0 0
    %1423 = vmatprep.subr.bf16.mxu0 0
    %1424 = vmatpush1.bf16.msra.mxu0 0
    %1425 = vmatprep.subr.bf16.mxu0 0
    %1426 = vmatpush1.bf16.msra.mxu0 0
    %1427 = vmatprep.subr.bf16.mxu0 0
    %1428 = vmatpush1.bf16.msra.mxu0 0
    %1429 = vmatprep.subr.bf16.mxu0 0
    %1430 = vmatpush1.bf16.msra.mxu0 0
    %1431 = vmatprep.subr.bf16.mxu0 0
    %1432 = vmatpush1.bf16.msra.mxu0 0
    %1433 = vmatprep.subr.bf16.mxu0 0
    %1434 = vmatpush1.bf16.msra.mxu0 0
    %1435 = vmatprep.mubr.bf16.mxu0 0
    %1436 = vmatmul.mubr.bf16.gmra.mrb[0].mxu0 %v1380
    %v1437 = vpop.f32.mrb[0].mxu0
    %v1438 = vadd.f32 %v1353, %v1437
    %v1439 = vpop.f32.mrb[0].mxu0
    %v1440 = vpop.f32.mrb[0].mxu0
    %v1441 = vadd.f32 %v1353, %v1440
    %v1442 = vpop.f32.mrb[0].mxu0
    %1443 = vmatprep.mubr.bf16.mxu0 0
    %1444 = vmatmul.mubr.bf16.gmra.mrb[0].mxu0 %v1383
    %v1445 = vpop.f32.mrb[0].mxu0
    %v1446 = vadd.f32 %v1353, %v1445
    %v1447 = vpop.f32.mrb[0].mxu0
    %v1448 = vpop.f32.mrb[0].mxu0
    %v1449 = vadd.f32 %v1353, %v1448
    %v1450 = vpop.f32.mrb[0].mxu0
    %1451 = vmatprep.mubr.bf16.mxu0 0
    %1452 = vmatmul.mubr.bf16.gmra.mrb[0].mxu0 %v1386
    %v1453 = vpop.f32.mrb[0].mxu0
    %v1454 = vadd.f32 %v1353, %v1453
    %v1455 = vpop.f32.mrb[0].mxu0
    %v1456 = vpop.f32.mrb[0].mxu0
    %v1457 = vadd.f32 %v1353, %v1456
    %v1458 = vpop.f32.mrb[0].mxu0
    %1459 = vmatprep.mubr.bf16.mxu0 0
    %1460 = vmatmul.mubr.bf16.gmra.mrb[0].mxu0 %v1389
    %v1461 = vpop.f32.mrb[0].mxu0
    %v1462 = vadd.f32 %v1353, %v1461
    %v1463 = vpop.f32.mrb[0].mxu0
    %v1464 = vpop.f32.mrb[0].mxu0
    %v1465 = vadd.f32 %v1353, %v1464
    %v1466 = vpop.f32.mrb[0].mxu0
    %1467 = vmatprep.mubr.bf16.mxu0 0
    %1468 = vmatmul.mubr.bf16.gmra.mrb[0].mxu0 %v1392
    %v1469 = vpop.f32.mrb[0].mxu0
    %v1470 = vadd.f32 %v1353, %v1469
    %v1471 = vpop.f32.mrb[0].mxu0
    %v1472 = vpop.f32.mrb[0].mxu0
    %v1473 = vadd.f32 %v1353, %v1472
    %v1474 = vpop.f32.mrb[0].mxu0
    %1475 = vmatprep.mubr.bf16.mxu0 0
    %1476 = vmatmul.mubr.bf16.gmra.mrb[0].mxu0 %v1395
    %v1477 = vpop.f32.mrb[0].mxu0
    %v1478 = vadd.f32 %v1353, %v1477
    %v1479 = vpop.f32.mrb[0].mxu0
    %v1480 = vpop.f32.mrb[0].mxu0
    %v1481 = vadd.f32 %v1353, %v1480
    %v1482 = vpop.f32.mrb[0].mxu0
    %1483 = vmatprep.mubr.bf16.mxu0 0
    %1484 = vmatmul.mubr.bf16.gmra.mrb[0].mxu0 %v1398
    %v1485 = vpop.f32.mrb[0].mxu0
    %v1486 = vadd.f32 %v1353, %v1485
    %v1487 = vpop.f32.mrb[0].mxu0
    %v1488 = vpop.f32.mrb[0].mxu0
    %v1489 = vadd.f32 %v1353, %v1488
    %v1490 = vpop.f32.mrb[0].mxu0
    %1491 = vmatprep.mubr.bf16.mxu0 0
    %1492 = vmatmul.mubr.bf16.gmra.mrb[0].mxu0 %v1401
    %v1493 = vpop.f32.mrb[0].mxu0
    %v1494 = vadd.f32 %v1353, %v1493
    %v1495 = vpop.f32.mrb[0].mxu0
    %v1496 = vpop.f32.mrb[0].mxu0
    %v1497 = vadd.f32 %v1353, %v1496
    %v1498 = vpop.f32.mrb[0].mxu0
    %1499 = vdwg.mxu0
    %v1500 = vld [vmem:[%s13] sm:$0xff]
    %v1501 = vld [vmem:[%s13 + $0x8] sm:$0xff]
    %v1502 = vld [vmem:[%s13 + $0x10] sm:$0xff]
    %v1503 = vld [vmem:[%s13 + $0x18] sm:$0xff]
    %v1504 = vld [vmem:[%s13 + $0x20] sm:$0xff]
    %v1505 = vld [vmem:[%s13 + $0x28] sm:$0xff]
    %v1506 = vld [vmem:[%s13 + $0x30] sm:$0xff]
    %v1507 = vld [vmem:[%s13 + $0x38] sm:$0xff]
    %v1508 = vld [vmem:[%s13 + $0x40] sm:$0xff]
    %v1509 = vld [vmem:[%s13 + $0x48] sm:$0xff]
    %v1510 = vld [vmem:[%s13 + $0x50] sm:$0xff]
    %v1511 = vld [vmem:[%s13 + $0x58] sm:$0xff]
    %v1512 = vld [vmem:[%s13 + $0x60] sm:$0xff]
    %v1513 = vld [vmem:[%s13 + $0x68] sm:$0xff]
    %v1514 = vld [vmem:[%s13 + $0x70] sm:$0xff]
    %v1515 = vld [vmem:[%s13 + $0x78] sm:$0xff]
    %v1516 = vpack.c.bf16 %v1501, %v1500
    %v1517 = vpack.c.bf16 %v1503, %v1502
    %v1518 = vpack.c.bf16 %v1505, %v1504
    %v1519 = vpack.c.bf16 %v1507, %v1506
    %v1520 = vpack.c.bf16 %v1509, %v1508
    %v1521 = vpack.c.bf16 %v1511, %v1510
    %v1522 = vpack.c.bf16 %v1513, %v1512
    %v1523 = vpack.c.bf16 %v1515, %v1514
    %v1524 = vld [vmem:[%s14] sm:$0xf]
    %v1525 = vld [vmem:[%s14 + $0x4] sm:$0xf]
    %v1526 = vld [vmem:[%s14 + $0x8] sm:$0xf]
    %v1527 = vld [vmem:[%s14 + $0xc] sm:$0xf]
    %v1528 = vld [vmem:[%s15] sm:$0x1]
    %v1530 = vlaneseq
    %v1531 = vshrl.u32 %v1530, 7
    %v1532 = vsub.s32 0, %v1531
    %v1533 = vrot.slane %v1528, %v1532
    %v1539 = vunpack.c.l.b16 %v1524
    %v1540 = vunpack.c.l.b16 %v1525
    %v1541 = vunpack.c.l.b16 %v1526
    %v1542 = vunpack.c.l.b16 %v1527
    %v1543 = vpack.c.b16 %v1540, %v1539
    %v1544 = vpack.c.b16 %v1542, %v1541
    %vm1547 = vcmask 261120
    %v1549 = vsel %vm1547, %v1516, 0
    %v1552 = vsel %vm1547, %v1517, 0
    %v1555 = vsel %vm1547, %v1518, 0
    %v1558 = vsel %vm1547, %v1519, 0
    %v1561 = vsel %vm1547, %v1520, 0
    %v1564 = vsel %vm1547, %v1521, 0
    %v1567 = vsel %vm1547, %v1522, 0
    %v1570 = vsel %vm1547, %v1523, 0
    %1572 = vmatprep.subr.bf16.mxu0 0
    %1573 = vmatpush1.bf16.msra.mxu0 %v1543
    %1574 = vmatprep.subr.bf16.mxu0 0
    %1575 = vmatpush1.bf16.msra.mxu0 %v1544
    %1576 = vmatprep.subr.bf16.mxu0 0
    %1577 = vmatpush1.bf16.msra.mxu0 0
    %1578 = vmatprep.subr.bf16.mxu0 0
    %1579 = vmatpush1.bf16.msra.mxu0 0
    %1580 = vmatprep.subr.bf16.mxu0 0
    %1581 = vmatpush1.bf16.msra.mxu0 0
    %1582 = vmatprep.subr.bf16.mxu0 0
    %1583 = vmatpush1.bf16.msra.mxu0 0
    %1584 = vmatprep.subr.bf16.mxu0 0
    %1585 = vmatpush1.bf16.msra.mxu0 0
    %1586 = vmatprep.subr.bf16.mxu0 0
    %1587 = vmatpush1.bf16.msra.mxu0 0
    %1588 = vmatprep.subr.bf16.mxu0 0
    %1589 = vmatpush1.bf16.msra.mxu0 0
    %1590 = vmatprep.subr.bf16.mxu0 0
    %1591 = vmatpush1.bf16.msra.mxu0 0
    %1592 = vmatprep.subr.bf16.mxu0 0
    %1593 = vmatpush1.bf16.msra.mxu0 0
    %1594 = vmatprep.subr.bf16.mxu0 0
    %1595 = vmatpush1.bf16.msra.mxu0 0
    %1596 = vmatprep.subr.bf16.mxu0 0
    %1597 = vmatpush1.bf16.msra.mxu0 0
    %1598 = vmatprep.subr.bf16.mxu0 0
    %1599 = vmatpush1.bf16.msra.mxu0 0
    %1600 = vmatprep.subr.bf16.mxu0 0
    %1601 = vmatpush1.bf16.msra.mxu0 0
    %1602 = vmatprep.subr.bf16.mxu0 0
    %1603 = vmatpush1.bf16.msra.mxu0 0
    %1604 = vmatprep.mubr.bf16.mxu0 0
    %1605 = vmatmul.mubr.bf16.gmra.mrb[0].mxu0 %v1549
    %v1606 = vpop.f32.mrb[0].mxu0
    %v1607 = vadd.f32 %v1533, %v1606
    %v1608 = vpop.f32.mrb[0].mxu0
    %v1609 = vpop.f32.mrb[0].mxu0
    %v1610 = vadd.f32 %v1533, %v1609
    %v1611 = vpop.f32.mrb[0].mxu0
    %1612 = vmatprep.mubr.bf16.mxu0 0
    %1613 = vmatmul.mubr.bf16.gmra.mrb[0].mxu0 %v1552
    %v1614 = vpop.f32.mrb[0].mxu0
    %v1615 = vadd.f32 %v1533, %v1614
    %v1616 = vpop.f32.mrb[0].mxu0
    %v1617 = vpop.f32.mrb[0].mxu0
    %v1618 = vadd.f32 %v1533, %v1617
    %v1619 = vpop.f32.mrb[0].mxu0
    %1620 = vmatprep.mubr.bf16.mxu0 0
    %1621 = vmatmul.mubr.bf16.gmra.mrb[0].mxu0 %v1555
    %v1622 = vpop.f32.mrb[0].mxu0
    %v1623 = vadd.f32 %v1533, %v1622
    %v1624 = vpop.f32.mrb[0].mxu0
    %v1625 = vpop.f32.mrb[0].mxu0
    %v1626 = vadd.f32 %v1533, %v1625
    %v1627 = vpop.f32.mrb[0].mxu0
    %1628 = vmatprep.mubr.bf16.mxu0 0
    %1629 = vmatmul.mubr.bf16.gmra.mrb[0].mxu0 %v1558
    %v1630 = vpop.f32.mrb[0].mxu0
    %v1631 = vadd.f32 %v1533, %v1630
    %v1632 = vpop.f32.mrb[0].mxu0
    %v1633 = vpop.f32.mrb[0].mxu0
    %v1634 = vadd.f32 %v1533, %v1633
    %v1635 = vpop.f32.mrb[0].mxu0
    %1636 = vmatprep.mubr.bf16.mxu0 0
    %1637 = vmatmul.mubr.bf16.gmra.mrb[0].mxu0 %v1561
    %v1638 = vpop.f32.mrb[0].mxu0
    %v1639 = vadd.f32 %v1533, %v1638
    %v1640 = vpop.f32.mrb[0].mxu0
    %v1641 = vpop.f32.mrb[0].mxu0
    %v1642 = vadd.f32 %v1533, %v1641
    %v1643 = vpop.f32.mrb[0].mxu0
    %1644 = vmatprep.mubr.bf16.mxu0 0
    %1645 = vmatmul.mubr.bf16.gmra.mrb[0].mxu0 %v1564
    %v1646 = vpop.f32.mrb[0].mxu0
    %v1647 = vadd.f32 %v1533, %v1646
    %v1648 = vpop.f32.mrb[0].mxu0
    %v1649 = vpop.f32.mrb[0].mxu0
    %v1650 = vadd.f32 %v1533, %v1649
    %v1651 = vpop.f32.mrb[0].mxu0
    %1652 = vmatprep.mubr.bf16.mxu0 0
    %1653 = vmatmul.mubr.bf16.gmra.mrb[0].mxu0 %v1567
    %v1654 = vpop.f32.mrb[0].mxu0
    %v1655 = vadd.f32 %v1533, %v1654
    %v1656 = vpop.f32.mrb[0].mxu0
    %v1657 = vpop.f32.mrb[0].mxu0
    %v1658 = vadd.f32 %v1533, %v1657
    %v1659 = vpop.f32.mrb[0].mxu0
    %1660 = vmatprep.mubr.bf16.mxu0 0
    %1661 = vmatmul.mubr.bf16.gmra.mrb[0].mxu0 %v1570
    %v1662 = vpop.f32.mrb[0].mxu0
    %v1663 = vadd.f32 %v1533, %v1662
    %v1664 = vpop.f32.mrb[0].mxu0
    %v1665 = vpop.f32.mrb[0].mxu0
    %v1666 = vadd.f32 %v1533, %v1665
    %v1667 = vpop.f32.mrb[0].mxu0
    %1668 = vdwg.mxu0
    %v1669 = vadd.f32 %v1438, %v1607
    %v1670 = vadd.f32 %v1441, %v1610
    %v1671 = vadd.f32 %v1446, %v1615
    %v1672 = vadd.f32 %v1449, %v1618
    %v1673 = vadd.f32 %v1454, %v1623
    %v1674 = vadd.f32 %v1457, %v1626
    %v1675 = vadd.f32 %v1462, %v1631
    %v1676 = vadd.f32 %v1465, %v1634
    %v1677 = vadd.f32 %v1470, %v1639
    %v1678 = vadd.f32 %v1473, %v1642
    %v1679 = vadd.f32 %v1478, %v1647
    %v1680 = vadd.f32 %v1481, %v1650
    %v1681 = vadd.f32 %v1486, %v1655
    %v1682 = vadd.f32 %v1489, %v1658
    %v1683 = vadd.f32 %v1494, %v1663
    %v1684 = vadd.f32 %v1497, %v1666
    %1685 = vst.msk [vmem:[#allocation2] sm:$0xff] %vm470, %v1669
    %1686 = vst.msk [vmem:[#allocation2 + $0x8] sm:$0xff] %vm470, %v1670
    %1687 = vst.msk [vmem:[#allocation2 + $0x10] sm:$0xff] %vm470, %v1671
    %1688 = vst.msk [vmem:[#allocation2 + $0x18] sm:$0xff] %vm470, %v1672
    %1689 = vst.msk [vmem:[#allocation2 + $0x20] sm:$0xff] %vm470, %v1673
    %1690 = vst.msk [vmem:[#allocation2 + $0x28] sm:$0xff] %vm470, %v1674
    %1691 = vst.msk [vmem:[#allocation2 + $0x30] sm:$0xff] %vm470, %v1675
    %1692 = vst.msk [vmem:[#allocation2 + $0x38] sm:$0xff] %vm470, %v1676
    %1693 = vst.msk [vmem:[#allocation2 + $0x40] sm:$0xff] %vm470, %v1677
    %1694 = vst.msk [vmem:[#allocation2 + $0x48] sm:$0xff] %vm470, %v1678
    %1695 = vst.msk [vmem:[#allocation2 + $0x50] sm:$0xff] %vm470, %v1679
    %1696 = vst.msk [vmem:[#allocation2 + $0x58] sm:$0xff] %vm470, %v1680
    %1697 = vst.msk [vmem:[#allocation2 + $0x60] sm:$0xff] %vm470, %v1681
    %1698 = vst.msk [vmem:[#allocation2 + $0x68] sm:$0xff] %vm470, %v1682
    %1699 = vst.msk [vmem:[#allocation2 + $0x70] sm:$0xff] %vm470, %v1683
    %1700 = vst.msk [vmem:[#allocation2 + $0x78] sm:$0xff] %vm470, %v1684
    // Predicated region
    $region66: #{prebottleneck_forward.3} parent=1 // pred_check
      _
    $region67: #{prebottleneck_forward.3} parent=1 // pred_check_branch
      %1702 = sbr.rel (0) target = $region69
    $region68: #{prebottleneck_forward.3} parent=1 // pred_region
      %s1704 = ssub.s32 2048, 2048
      %1705 = vsyncadd [#allocation3], %s1704
      %s1706 = sshll.u32 [#allocation2], 4
      %s1707 = int_to_ptr.vmem [resolvable:$true] %s1706
      %1712 = dma.vmem_to_hbm [thread:$0]  %s1707, 2048, %s16, [#allocation3], 128, 128, 8
    $region69: #{prebottleneck_forward.3} parent=1 // pred_fallthru
      _
    // Predicated region
    $region70: #{prebottleneck_forward.3} parent=1 // pred_check
      _
    $region71: #{prebottleneck_forward.3} parent=1 // pred_check_branch
      %1714 = sbr.rel (0) target = $region73
    $region72: #{prebottleneck_forward.3} parent=1 // pred_region
      %1715 = dma.done [#allocation3], 2048
    $region73: #{prebottleneck_forward.3} parent=1 // pred_fallthru
      _
    %1716 = vsyncpa [#allocation3], 1

</llo_original>
